<compile_context>
chip_gen: v5e
topology: v5e:2x2
jax: 0.10.0
libtpu: 0.0.40
codegen_flags: <defaults>
</compile_context>

<pallas_src>
import functools

import jax
import jax.numpy as jnp
from jax import lax
from jax.experimental import pallas as pl
from jax.experimental.pallas import tpu as pltpu

BN_EPS = 1e-5


def _round_up(x, m):
    return (x + m - 1) // m * m


def _plan_pass1(m, k, cout):
    """Pick pass-1 tile sizes and padded extents."""
    # Contraction tile (lane dim of the patch matrix): 256-multiples fully feed
    # the 256-wide MXU of v6e/v7x; capped at 512 to bound VMEM.
    tk = min(512, _round_up(max(k, 1), 128))
    # Output-channel tile: cover all channels when small so the inflated patch
    # matrix is read from HBM exactly once (num_n == 1).
    c128 = _round_up(max(cout, 1), 128)
    tn = c128 if c128 <= 512 else 256
    # Row tile: big enough that the ~0.35us/step overhead is negligible, small
    # enough for comfortable double buffering on the 64 MiB-VMEM v7x.
    tm = min(512, _round_up(max(m, 1), 8))
    k_pad = _round_up(k, tk)
    c_pad = _round_up(cout, tn)
    m_pad = _round_up(m, tm)
    # Keep weights VMEM-resident (constant index_map) when they fit.
    w_resident = (k_pad * c_pad * 2) <= 12 * 1024 * 1024
    return tm, tk, tn, m_pad, k_pad, c_pad, w_resident


def conv_stats_kernel(p_ref, w_ref, conv_ref, stats_ref, acc_ref, *,
                      tm, tk, tn, m_true, w_resident):
    """One (tm, tn) conv tile accumulated over the K grid axis (last axis).

    p_ref:     (tm, tk) bf16 im2col patch tile
    w_ref:     (k_pad, c_pad) bf16 resident weights, or (tk, tn) tile
    conv_ref:  (tm, tn) f32 conv output tile (written at last K step)
    stats_ref: (8, tn) f32: sublane 0 = per-channel sum, sublane 1 = centered M2
    acc_ref:   (tm, tn) f32 VMEM accumulator scratch
    """
    i = pl.program_id(0)
    j = pl.program_id(1)
    kk = pl.program_id(2)

    @pl.when(kk == 0)
    def _init():
        acc_ref[...] = jnp.zeros_like(acc_ref)

    if w_resident:
        w = w_ref[pl.ds(pl.multiple_of(kk * tk, tk), tk),
                  pl.ds(pl.multiple_of(j * tn, tn), tn)]
    else:
        w = w_ref[...]
    acc_ref[...] += jnp.dot(p_ref[...], w, preferred_element_type=jnp.float32)

    @pl.when(kk == pl.num_programs(2) - 1)
    def _finalize():
        acc = acc_ref[...]
        conv_ref[...] = acc
        # Per-tile centered statistics (Chan-combinable). Padded rows of the
        # conv output are exactly zero, so the plain sum is exact; they are
        # masked out of the centered second moment.
        valid = jnp.minimum(m_true - i * tm, tm)            # >= 1 per tile
        inv_valid = 1.0 / valid.astype(jnp.float32)
        s = jnp.sum(acc, axis=0, keepdims=True)             # (1, tn)
        mean_i = s * inv_valid
        row = lax.broadcasted_iota(jnp.int32, (tm, tn), 0)
        d = jnp.where(row < valid, acc - mean_i, 0.0)
        m2 = jnp.sum(d * d, axis=0, keepdims=True)          # (1, tn)
        stats_ref[...] = jnp.zeros_like(stats_ref)
        stats_ref[0:1, :] = s
        stats_ref[1:2, :] = m2


def normalize_kernel(conv_ref, scale_ref, shift_ref, out_ref):
    # BN folded into one FMA per element: y = conv * scale + shift.
    out_ref[...] = (conv_ref[...] * scale_ref[...]
                    + shift_ref[...]).astype(out_ref.dtype)


@functools.partial(jax.jit, static_argnames=("strides", "padding", "dilation"))
def conv2d_normed(x, weight, gamma, beta, *, strides=(1, 1), padding=(0, 0),
                  dilation=(1, 1)):
    """Forward of Conv2DNormed (groups=1, bias=False, BatchNorm in training
    mode).  x: (N, Cin, H, W); weight: (Cout, Cin, KH, KW)."""
    n = x.shape[0]
    cout, cin, kh, kw = weight.shape

    # TODO(synk): implicit im2col inside the kernel (input in memory_space=
    # pl.ANY + halo DMAs into a VMEM slab) would remove the KH*KW-inflated HBM
    # patch tensor entirely; interim: one fused XLA patch-extraction op, bf16.
    p = lax.conv_general_dilated_patches(
        x.astype(jnp.bfloat16), (kh, kw), strides,
        [(padding[0], padding[0]), (padding[1], padding[1])],
        rhs_dilation=dilation,
        dimension_numbers=("NCHW", "OIHW", "NCHW"))   # (N, Cin*KH*KW, OH, OW)
    oh, ow = p.shape[2], p.shape[3]
    patches = p.transpose(0, 2, 3, 1).reshape(n * oh * ow, cin * kh * kw)
    m, k = patches.shape

    tm, tk, tn, m_pad, k_pad, c_pad, w_resident = _plan_pass1(m, k, cout)
    num_m, num_n, num_k = m_pad // tm, c_pad // tn, k_pad // tk

    # (Cout, Cin, KH, KW) -> (Cin*KH*KW, Cout); flatten order matches the
    # channel ordering of conv_general_dilated_patches (cin-major, then kh, kw).
    w2d = weight.astype(jnp.bfloat16).reshape(cout, cin * kh * kw).T

    # Pad to the tile grid (zeros perturb neither the matmul nor the stats).
    patches_p = jnp.pad(patches, ((0, m_pad - m), (0, k_pad - k)))
    w_p = jnp.pad(w2d, ((0, k_pad - k), (0, c_pad - cout)))
    gamma_p = jnp.pad(gamma.astype(jnp.float32), (0, c_pad - cout))
    beta_p = jnp.pad(beta.astype(jnp.float32), (0, c_pad - cout))

    if w_resident:
        w_spec = pl.BlockSpec((k_pad, c_pad), lambda i, j, kk: (0, 0))
        w_bytes = k_pad * c_pad * 2
    else:
        w_spec = pl.BlockSpec((tk, tn), lambda i, j, kk: (kk, j))
        w_bytes = k_pad * c_pad * 2 * num_m

    kernel1 = functools.partial(conv_stats_kernel, tm=tm, tk=tk, tn=tn,
                                m_true=m, w_resident=w_resident)

    # Pass 1: tiled MXU matmul (bf16 in, f32 accumulate) + partial BN stats.
    conv_f32, stats = pl.pallas_call(
        kernel1,
        out_shape=(jax.ShapeDtypeStruct((m_pad, c_pad), jnp.float32),
                   jax.ShapeDtypeStruct((num_m * 8, c_pad), jnp.float32)),
        grid_spec=pltpu.PrefetchScalarGridSpec(
            num_scalar_prefetch=0,
            grid=(num_m, num_n, num_k),
            in_specs=[pl.BlockSpec((tm, tk), lambda i, j, kk: (i, kk)),
                      w_spec],
            out_specs=[pl.BlockSpec((tm, tn), lambda i, j, kk: (i, j)),
                       pl.BlockSpec((8, tn), lambda i, j, kk: (i, j))],
            scratch_shapes=[pltpu.VMEM((tm, tn), jnp.float32)]),
        compiler_params=pltpu.CompilerParams(
            dimension_semantics=("parallel", "parallel", "arbitrary"),
            vmem_limit_bytes=48 * 1024 * 1024),
        cost_estimate=pl.CostEstimate(
            flops=2 * m_pad * k_pad * c_pad,
            transcendentals=0,
            bytes_accessed=(m_pad * k_pad * 2 * num_n + w_bytes
                            + m_pad * c_pad * 4 + num_m * 8 * c_pad * 4)),
    )(patches_p, w_p)

    # Combine per-tile (sum, centered M2) with Chan's parallel-variance formula
    # (exact two-pass-quality variance, no E[x^2]-mean^2 cancellation), then
    # fold BatchNorm into a per-channel FMA.
    stats3 = stats.reshape(num_m, 8, c_pad)
    sum_i = stats3[:, 0, :]                                   # (num_m, c_pad)
    m2_i = stats3[:, 1, :]
    n_i = jnp.minimum(m - jnp.arange(num_m) * tm, tm).astype(jnp.float32)
    mean = jnp.sum(sum_i, axis=0) / float(m)
    mean_i = sum_i / n_i[:, None]
    m2_tot = jnp.sum(m2_i, axis=0) + jnp.sum(
        n_i[:, None] * (mean_i - mean[None, :]) ** 2, axis=0)
    var = m2_tot / float(m)                                   # biased, like BN
    inv_std = lax.rsqrt(var + BN_EPS)
    scale = (gamma_p * inv_std).reshape(1, c_pad)
    shift = (beta_p - mean * gamma_p * inv_std).reshape(1, c_pad)

    # Pass 2: lane-dense elementwise normalize, written in place (aliased).
    tn2 = c_pad if tm * c_pad * 4 <= 4 * 1024 * 1024 else tn
    num_n2 = c_pad // tn2
    y2d = pl.pallas_call(
        normalize_kernel,
        out_shape=jax.ShapeDtypeStruct((m_pad, c_pad), jnp.float32),
        grid_spec=pltpu.PrefetchScalarGridSpec(
            num_scalar_prefetch=0,
            grid=(num_m, num_n2),
            in_specs=[pl.BlockSpec((tm, tn2), lambda i, j: (i, j)),
                      pl.BlockSpec((1, tn2), lambda i, j: (0, j)),
                      pl.BlockSpec((1, tn2), lambda i, j: (0, j))],
            out_specs=pl.BlockSpec((tm, tn2), lambda i, j: (i, j))),
        compiler_params=pltpu.CompilerParams(
            dimension_semantics=("parallel", "parallel"),
            vmem_limit_bytes=32 * 1024 * 1024),
        cost_estimate=pl.CostEstimate(
            flops=2 * m_pad * c_pad, transcendentals=0,
            bytes_accessed=2 * m_pad * c_pad * 4),
        input_output_aliases={0: 0},
    )(conv_f32, scale, shift)

    # TODO(synk): emit a (c_pad, m_pad) transposed output from pass 2 (XLU tile
    # transpose) so only a cheap leading-dim swap remains instead of this full
    # NHWC->NCHW relayout in XLA.
    return y2d[:m, :cout].reshape(n, oh, ow, cout).transpose(0, 3, 1, 2)


def _reference(x, weight, gamma, beta, strides, padding, dilation):
    """Pure-JAX reference (bf16 conv with f32 accumulation + batch-norm)."""
    y = lax.conv_general_dilated(
        x.astype(jnp.bfloat16), weight.astype(jnp.bfloat16),
        window_strides=strides,
        padding=[(padding[0], padding[0]), (padding[1], padding[1])],
        rhs_dilation=dilation,
        dimension_numbers=("NCHW", "OIHW", "NCHW"),
        preferred_element_type=jnp.float32)
    mean = jnp.mean(y, axis=(0, 2, 3), keepdims=True)
    var = jnp.mean((y - mean) ** 2, axis=(0, 2, 3), keepdims=True)
    g = gamma.reshape(1, -1, 1, 1)
    b = beta.reshape(1, -1, 1, 1)
    return (y - mean) * lax.rsqrt(var + BN_EPS) * g + b


if __name__ == "__main__":
    # Conv2DNormed defaults: strides=(1,1), padding=(0,0), dilation=(1,1),
    # BatchNorm, groups=1, no bias.
    N, CIN, H, W = 2, 4, 16, 16
    COUT, KH, KW = 8, 3, 3
    strides, padding, dilation = (1, 1), (0, 0), (1, 1)

    key = jax.random.PRNGKey(0)
    kx, kw_ = jax.random.split(key)
    x = jax.random.normal(kx, (N, CIN, H, W), dtype=jnp.float32)
    weight = jax.random.normal(kw_, (COUT, CIN, KH, KW), dtype=jnp.float32) * 0.1
    gamma = jnp.ones((COUT,), jnp.float32)     # BatchNorm2d affine defaults
    beta = jnp.zeros((COUT,), jnp.float32)

    out = conv2d_normed(x, weight, gamma, beta,
                        strides=strides, padding=padding, dilation=dilation)
    out = jax.block_until_ready(out)

    ref = _reference(x, weight, gamma, beta, strides, padding, dilation)
    assert out.shape == ref.shape, (out.shape, ref.shape)
    max_err = float(jnp.max(jnp.abs(out - ref)))
    assert jnp.allclose(out, ref, atol=2e-3, rtol=2e-3), \
        f"mismatch vs reference (max_err={max_err})"
    print("KERNEL_OK")
</pallas_src>

<mosaic_0001>
module attributes {stable_mosaic.version = 11 : i64} {
  func.func @conv_stats_kernel(%arg0: i32, %arg1: i32, %arg2: i32, %arg3: memref<392x128xbf16, #tpu.memory_space<vmem>>, %arg4: memref<128x128xbf16, #tpu.memory_space<vmem>>, %arg5: memref<392x128xf32, #tpu.memory_space<vmem>>, %arg6: memref<8x128xf32, #tpu.memory_space<vmem>>, %arg7: memref<392x128xf32, #tpu.memory_space<vmem>>) attributes {dimension_semantics = [#tpu.dimension_semantics<parallel>, #tpu.dimension_semantics<parallel>, #tpu.dimension_semantics<arbitrary>], iteration_bounds = array<i64: 1, 1, 1>, scalar_prefetch = 0 : i64, scratch_operands = 1 : i64, tpu.core_type = #tpu.core_type<tc>, window_params = [{transform_indices = @transform_0, window_bounds = array<i64: 392, 128>}, {pipeline_mode = #tpu.pipeline_mode<synchronous>, transform_indices = @transform_1, window_bounds = array<i64: 128, 128>}, {transform_indices = @transform_2, window_bounds = array<i64: 392, 128>}, {transform_indices = @transform_3, window_bounds = array<i64: 8, 128>}]} {
    %c0_i32 = arith.constant 0 : i32
    %0 = arith.cmpi eq, %arg2, %c0_i32 : i32
    %1 = arith.extui %0 : i1 to i32
    %c0_i32_0 = arith.constant 0 : i32
    %2 = arith.cmpi ne, %1, %c0_i32_0 : i32
    scf.if %2 {
      %cst_9 = arith.constant 0.000000e+00 : f32
      %18 = vector.broadcast %cst_9 : f32 to vector<392x128xf32>
      %c0_10 = arith.constant 0 : index
      %c0_11 = arith.constant 0 : index
      %19 = vector.load %arg7[%c0_10, %c0_11] : memref<392x128xf32, #tpu.memory_space<vmem>>, vector<392x128xf32>
      tpu.vector_store %arg7[%c0_10, %c0_11], %18 {strides = array<i32>} : memref<392x128xf32, #tpu.memory_space<vmem>>, vector<392x128xf32>,
    } else {
    }
    %c128_i32 = arith.constant 128 : i32
    %3 = arith.muli %arg2, %c128_i32 : i32
    %4 = tpu.assume_multiple %3, 128 : i32
    %c128_i32_1 = arith.constant 128 : i32
    %5 = arith.muli %arg1, %c128_i32_1 : i32
    %6 = tpu.assume_multiple %5, 128 : i32
    %7 = arith.index_cast %4 : i32 to index
    %8 = arith.index_cast %6 : i32 to index
    %9 = vector.load %arg4[%7, %8] : memref<128x128xbf16, #tpu.memory_space<vmem>>, vector<128x128xbf16>
    %c0 = arith.constant 0 : index
    %c0_2 = arith.constant 0 : index
    %10 = vector.load %arg7[%c0, %c0_2] : memref<392x128xf32, #tpu.memory_space<vmem>>, vector<392x128xf32>
    %c0_3 = arith.constant 0 : index
    %c0_4 = arith.constant 0 : index
    %11 = vector.load %arg3[%c0_3, %c0_4] : memref<392x128xbf16, #tpu.memory_space<vmem>>, vector<392x128xbf16>
    %cst = arith.constant dense<0.000000e+00> : vector<392x128xf32>
    %12 = tpu.matmul %11, %9, %cst {dimension_numbers = #tpu.dot_dimension_numbers<[1], [0], [0], [1], [0, 0, 1, 1], [], []>} : vector<392x128xbf16>, vector<128x128xbf16>, vector<392x128xf32> -> vector<392x128xf32>
    %13 = arith.addf %10, %12 : vector<392x128xf32>
    %c0_5 = arith.constant 0 : index
    %c0_6 = arith.constant 0 : index
    %14 = vector.load %arg7[%c0_5, %c0_6] : memref<392x128xf32, #tpu.memory_space<vmem>>, vector<392x128xf32>
    tpu.vector_store %arg7[%c0_5, %c0_6], %13 {strides = array<i32>} : memref<392x128xf32, #tpu.memory_space<vmem>>, vector<392x128xf32>,
    %c0_i32_7 = arith.constant 0 : i32
    %15 = arith.cmpi eq, %arg2, %c0_i32_7 : i32
    %16 = arith.extui %15 : i1 to i32
    %c0_i32_8 = arith.constant 0 : i32
    %17 = arith.cmpi ne, %16, %c0_i32_8 : i32
    scf.if %17 {
      %c0_9 = arith.constant 0 : index
      %c0_10 = arith.constant 0 : index
      %18 = vector.load %arg7[%c0_9, %c0_10] : memref<392x128xf32, #tpu.memory_space<vmem>>, vector<392x128xf32>
      %c0_11 = arith.constant 0 : index
      %c0_12 = arith.constant 0 : index
      %19 = vector.load %arg5[%c0_11, %c0_12] : memref<392x128xf32, #tpu.memory_space<vmem>>, vector<392x128xf32>
      tpu.vector_store %arg5[%c0_11, %c0_12], %18 {strides = array<i32>} : memref<392x128xf32, #tpu.memory_space<vmem>>, vector<392x128xf32>,
      %c392_i32 = arith.constant 392 : i32
      %20 = arith.muli %arg0, %c392_i32 : i32
      %c392_i32_13 = arith.constant 392 : i32
      %21 = arith.subi %c392_i32_13, %20 : i32
      %c392_i32_14 = arith.constant 392 : i32
      %22 = arith.minsi %21, %c392_i32_14 : i32
      %23 = arith.sitofp %22 : i32 to f32
      %cst_15 = arith.constant 1.000000e+00 : f32
      %24 = arith.divf %cst_15, %23 : f32
      %cst_16 = arith.constant dense<0.000000e+00> : vector<128xf32>
      %25 = vector.multi_reduction <add>, %18, %cst_16 [0] : vector<392x128xf32> to vector<128xf32>
      %26 = vector.shape_cast %25 : vector<128xf32> to vector<1x128xf32>
      %27 = vector.broadcast %24 : f32 to vector<1x128xf32>
      %28 = arith.mulf %26, %27 : vector<1x128xf32>
      %29 = tpu.iota {dimensions = array<i32: 0>} : vector<392x128xi32>
      %30 = vector.broadcast %22 : i32 to vector<392x128xi32>
      %31 = arith.cmpi slt, %29, %30 : vector<392x128xi32>
      %32 = vector.broadcast %28 : vector<1x128xf32> to vector<392x128xf32>
      %33 = arith.subf %18, %32 : vector<392x128xf32>
      %cst_17 = arith.constant 0.000000e+00 : f32
      %34 = vector.broadcast %cst_17 : f32 to vector<392x128xf32>
      %35 = arith.select %31, %33, %34 : vector<392x128xi1>, vector<392x128xf32>
      %36 = arith.mulf %35, %35 : vector<392x128xf32>
      %cst_18 = arith.constant dense<0.000000e+00> : vector<128xf32>
      %37 = vector.multi_reduction <add>, %36, %cst_18 [0] : vector<392x128xf32> to vector<128xf32>
      %38 = vector.shape_cast %37 : vector<128xf32> to vector<1x128xf32>
      %cst_19 = arith.constant 0.000000e+00 : f32
      %39 = vector.broadcast %cst_19 : f32 to vector<8x128xf32>
      %c0_20 = arith.constant 0 : index
      %c0_21 = arith.constant 0 : index
      %40 = vector.load %arg6[%c0_20, %c0_21] : memref<8x128xf32, #tpu.memory_space<vmem>>, vector<8x128xf32>
      tpu.vector_store %arg6[%c0_20, %c0_21], %39 {strides = array<i32>} : memref<8x128xf32, #tpu.memory_space<vmem>>, vector<8x128xf32>,
      %c0_22 = arith.constant 0 : index
      %c0_23 = arith.constant 0 : index
      %41 = vector.load %arg6[%c0_22, %c0_23] : memref<8x128xf32, #tpu.memory_space<vmem>>, vector<1x128xf32>
      tpu.vector_store %arg6[%c0_22, %c0_23], %26 {strides = array<i32>} : memref<8x128xf32, #tpu.memory_space<vmem>>, vector<1x128xf32>,
      %c1 = arith.constant 1 : index
      %c0_24 = arith.constant 0 : index
      %42 = vector.load %arg6[%c1, %c0_24] : memref<8x128xf32, #tpu.memory_space<vmem>>, vector<1x128xf32>
      tpu.vector_store %arg6[%c1, %c0_24], %38 {strides = array<i32>} : memref<8x128xf32, #tpu.memory_space<vmem>>, vector<1x128xf32>,
    } else {
    }
    return
  }
  func.func @transform_0(%arg0: i32, %arg1: i32, %arg2: i32) -> (i32, i32) {
    %c0_i32 = arith.constant 0 : i32
    return %arg0, %arg2 : i32, i32
  }
  func.func @transform_1(%arg0: i32, %arg1: i32, %arg2: i32) -> (i32, i32) {
    %c0_i32 = arith.constant 0 : i32
    %c0_i32_0 = arith.constant 0 : i32
    %c0_i32_1 = arith.constant 0 : i32
    return %c0_i32, %c0_i32_0 : i32, i32
  }
  func.func @transform_2(%arg0: i32, %arg1: i32, %arg2: i32) -> (i32, i32) {
    %c0_i32 = arith.constant 0 : i32
    return %arg0, %arg1 : i32, i32
  }
  func.func @transform_3(%arg0: i32, %arg1: i32, %arg2: i32) -> (i32, i32) {
    %c0_i32 = arith.constant 0 : i32
    return %arg0, %arg1 : i32, i32
  }
}

module attributes {stable_mosaic.version = 11 : i64} {
  func.func @normalize_kernel(%arg0: i32, %arg1: i32, %arg2: memref<392x128xf32, #tpu.memory_space<vmem>>, %arg3: memref<1x128xf32, #tpu.memory_space<vmem>>, %arg4: memref<1x128xf32, #tpu.memory_space<vmem>>, %arg5: memref<392x128xf32, #tpu.memory_space<vmem>>) attributes {dimension_semantics = [#tpu.dimension_semantics<parallel>, #tpu.dimension_semantics<parallel>], iteration_bounds = array<i64: 1, 1>, scalar_prefetch = 0 : i64, scratch_operands = 0 : i64, tpu.core_type = #tpu.core_type<tc>, window_params = [{transform_indices = @transform_0, window_bounds = array<i64: 392, 128>}, {transform_indices = @transform_1, window_bounds = array<i64: 1, 128>}, {transform_indices = @transform_2, window_bounds = array<i64: 1, 128>}, {transform_indices = @transform_3, window_bounds = array<i64: 392, 128>}]} {
    %c0 = arith.constant 0 : index
    %c0_0 = arith.constant 0 : index
    %0 = vector.load %arg2[%c0, %c0_0] : memref<392x128xf32, #tpu.memory_space<vmem>>, vector<392x128xf32>
    %c0_1 = arith.constant 0 : index
    %c0_2 = arith.constant 0 : index
    %1 = vector.load %arg3[%c0_1, %c0_2] : memref<1x128xf32, #tpu.memory_space<vmem>>, vector<1x128xf32>
    %2 = vector.broadcast %1 : vector<1x128xf32> to vector<392x128xf32>
    %3 = arith.mulf %0, %2 : vector<392x128xf32>
    %c0_3 = arith.constant 0 : index
    %c0_4 = arith.constant 0 : index
    %4 = vector.load %arg4[%c0_3, %c0_4] : memref<1x128xf32, #tpu.memory_space<vmem>>, vector<1x128xf32>
    %5 = vector.broadcast %4 : vector<1x128xf32> to vector<392x128xf32>
    %6 = arith.addf %3, %5 : vector<392x128xf32>
    %c0_5 = arith.constant 0 : index
    %c0_6 = arith.constant 0 : index
    %7 = vector.load %arg5[%c0_5, %c0_6] : memref<392x128xf32, #tpu.memory_space<vmem>>, vector<392x128xf32>
    tpu.vector_store %arg5[%c0_5, %c0_6], %6 {strides = array<i32>} : memref<392x128xf32, #tpu.memory_space<vmem>>, vector<392x128xf32>,
    return
  }
  func.func @transform_0(%arg0: i32, %arg1: i32) -> (i32, i32) {
    %c0_i32 = arith.constant 0 : i32
    return %arg0, %arg1 : i32, i32
  }
  func.func @transform_1(%arg0: i32, %arg1: i32) -> (i32, i32) {
    %c0_i32 = arith.constant 0 : i32
    %c0_i32_0 = arith.constant 0 : i32
    return %c0_i32, %arg1 : i32, i32
  }
  func.func @transform_2(%arg0: i32, %arg1: i32) -> (i32, i32) {
    %c0_i32 = arith.constant 0 : i32
    %c0_i32_0 = arith.constant 0 : i32
    return %c0_i32, %arg1 : i32, i32
  }
  func.func @transform_3(%arg0: i32, %arg1: i32) -> (i32, i32) {
    %c0_i32 = arith.constant 0 : i32
    return %arg0, %arg1 : i32, i32
  }
}

</mosaic_0001>

<llo_original>
// kernel: conv2d_normed.3
$region0: #{conv2d_normed.3}
  #allocation0 [shape = 'u32[]', space=smem, size = 0x4, offset = 0x4, fixed_abs, tag = 'smem constant byte address 0x4 - core index']
  #allocation1 [shape = 'u32[72,128]{1,0:T(1,128)}', space=vmem, size = 0x9000, scoped, tag = 'internal scratch']
  %s0 = inlined_call_operand.vmem [shape: f32[392,128], index: 0, kind: input, shape index: {}, may-alias: {0,3}]
  %s1 = inlined_call_operand.vmem [shape: f32[1,128], index: 1, kind: input, shape index: {}]
  %s2 = inlined_call_operand.vmem [shape: f32[1,128], index: 2, kind: input, shape index: {}]
  %s3 = inlined_call_operand.vmem [shape: f32[392,128], index: 3, kind: output, shape index: {}, may-alias: {0,3}]
  %s4 = sld [smem:[#allocation0]]
  $region22: #{conv2d_normed.3} parent=0
    _
  %s6 = ssub.s32 1, %s4
  %s7 = scalar_select 0, %s6, %s4
  // Predicated region
  $region2: #{conv2d_normed.3} parent=0 // pred_check
    _
  $region3: #{conv2d_normed.3} parent=0 // pred_check_branch
    %9 = sbr.rel (0) target = $region5
  $region4: #{conv2d_normed.3} parent=0 // pred_region
    _
  $region5: #{conv2d_normed.3} parent=0 // pred_fallthru
    _
  // Predicated region
  $region6: #{conv2d_normed.3} parent=0 // pred_check
    _
  $region7: #{conv2d_normed.3} parent=0 // pred_check_branch
    %11 = sbr.rel (0) target = $region9
  $region8: #{conv2d_normed.3} parent=0 // pred_region
    _
  $region9: #{conv2d_normed.3} parent=0 // pred_fallthru
    _
  // Predicated region
  $region10: #{conv2d_normed.3} parent=0 // pred_check
    _
  $region11: #{conv2d_normed.3} parent=0 // pred_check_branch
    %13 = sbr.rel (0) target = $region13
  $region12: #{conv2d_normed.3} parent=0 // pred_region
    _
  $region13: #{conv2d_normed.3} parent=0 // pred_fallthru
    _
  %v14 = vld [vmem:[%s0] sm:$0xff]
  %v15 = vld [vmem:[%s0 + $0x8] sm:$0xff]
  %v16 = vld [vmem:[%s0 + $0x10] sm:$0xff]
  %v17 = vld [vmem:[%s0 + $0x18] sm:$0xff]
  %v18 = vld [vmem:[%s0 + $0x20] sm:$0xff]
  %v19 = vld [vmem:[%s0 + $0x28] sm:$0xff]
  %v20 = vld [vmem:[%s0 + $0x30] sm:$0xff]
  %v21 = vld [vmem:[%s0 + $0x38] sm:$0xff]
  %v22 = vld [vmem:[%s0 + $0x40] sm:$0xff]
  %v23 = vld [vmem:[%s0 + $0x48] sm:$0xff]
  %v24 = vld [vmem:[%s0 + $0x50] sm:$0xff]
  %v25 = vld [vmem:[%s0 + $0x58] sm:$0xff]
  %v26 = vld [vmem:[%s0 + $0x60] sm:$0xff]
  %v27 = vld [vmem:[%s0 + $0x68] sm:$0xff]
  %v28 = vld [vmem:[%s0 + $0x70] sm:$0xff]
  %v29 = vld [vmem:[%s0 + $0x78] sm:$0xff]
  %v30 = vld [vmem:[%s0 + $0x80] sm:$0xff]
  %v31 = vld [vmem:[%s0 + $0x88] sm:$0xff]
  %v32 = vld [vmem:[%s0 + $0x90] sm:$0xff]
  %v33 = vld [vmem:[%s0 + $0x98] sm:$0xff]
  %v34 = vld [vmem:[%s0 + $0xa0] sm:$0xff]
  %v35 = vld [vmem:[%s0 + $0xa8] sm:$0xff]
  %v36 = vld [vmem:[%s0 + $0xb0] sm:$0xff]
  %v37 = vld [vmem:[%s0 + $0xb8] sm:$0xff]
  %v38 = vld [vmem:[%s0 + $0xc0] sm:$0xff]
  %v39 = vld [vmem:[%s0 + $0xc8] sm:$0xff]
  %v40 = vld [vmem:[%s0 + $0xd0] sm:$0xff]
  %v41 = vld [vmem:[%s0 + $0xd8] sm:$0xff]
  %v42 = vld [vmem:[%s0 + $0xe0] sm:$0xff]
  %v43 = vld [vmem:[%s0 + $0xe8] sm:$0xff]
  %v44 = vld [vmem:[%s0 + $0xf0] sm:$0xff]
  %v45 = vld [vmem:[%s0 + $0xf8] sm:$0xff]
  %v46 = vld [vmem:[%s0 + $0x100] sm:$0xff]
  %v47 = vld [vmem:[%s0 + $0x108] sm:$0xff]
  %v48 = vld [vmem:[%s0 + $0x110] sm:$0xff]
  %v49 = vld [vmem:[%s0 + $0x118] sm:$0xff]
  %v50 = vld [vmem:[%s0 + $0x120] sm:$0xff]
  %v51 = vld [vmem:[%s0 + $0x128] sm:$0xff]
  %v52 = vld [vmem:[%s0 + $0x130] sm:$0xff]
  %v53 = vld [vmem:[%s0 + $0x138] sm:$0xff]
  %v54 = vld [vmem:[%s0 + $0x140] sm:$0xff]
  %v55 = vld [vmem:[%s0 + $0x148] sm:$0xff]
  %v56 = vld [vmem:[%s0 + $0x150] sm:$0xff]
  %v57 = vld [vmem:[%s0 + $0x158] sm:$0xff]
  %v58 = vld [vmem:[%s0 + $0x160] sm:$0xff]
  %v59 = vld [vmem:[%s0 + $0x168] sm:$0xff]
  %v60 = vld [vmem:[%s0 + $0x170] sm:$0xff]
  %v61 = vld [vmem:[%s0 + $0x178] sm:$0xff]
  %v62 = vld [vmem:[%s0 + $0x180] sm:$0xff]
  %v63 = vld [vmem:[%s1] sm:$0x1]
  %v65 = vperm.slane %v63, 0
  %v67 = vmul.f32 %v14, %v65
  %v68 = vmul.f32 %v15, %v65
  %v69 = vmul.f32 %v16, %v65
  %v70 = vmul.f32 %v17, %v65
  %v71 = vmul.f32 %v18, %v65
  %v72 = vmul.f32 %v19, %v65
  %v73 = vmul.f32 %v20, %v65
  %v74 = vmul.f32 %v21, %v65
  %v75 = vmul.f32 %v22, %v65
  %v76 = vmul.f32 %v23, %v65
  %v77 = vmul.f32 %v24, %v65
  %v78 = vmul.f32 %v25, %v65
  %v79 = vmul.f32 %v26, %v65
  %v80 = vmul.f32 %v27, %v65
  %v81 = vmul.f32 %v28, %v65
  %v82 = vmul.f32 %v29, %v65
  %v83 = vmul.f32 %v30, %v65
  %v84 = vmul.f32 %v31, %v65
  %v85 = vmul.f32 %v32, %v65
  %v86 = vmul.f32 %v33, %v65
  %v87 = vmul.f32 %v34, %v65
  %v88 = vmul.f32 %v35, %v65
  %v89 = vmul.f32 %v36, %v65
  %v90 = vmul.f32 %v37, %v65
  %v91 = vmul.f32 %v38, %v65
  %v92 = vmul.f32 %v39, %v65
  %v93 = vmul.f32 %v40, %v65
  %v94 = vmul.f32 %v41, %v65
  %v95 = vmul.f32 %v42, %v65
  %v96 = vmul.f32 %v43, %v65
  %v97 = vmul.f32 %v44, %v65
  %v98 = vmul.f32 %v45, %v65
  %v99 = vmul.f32 %v46, %v65
  %v100 = vmul.f32 %v47, %v65
  %v101 = vmul.f32 %v48, %v65
  %v102 = vmul.f32 %v49, %v65
  %v103 = vmul.f32 %v50, %v65
  %v104 = vmul.f32 %v51, %v65
  %v105 = vmul.f32 %v52, %v65
  %v106 = vmul.f32 %v53, %v65
  %v107 = vmul.f32 %v54, %v65
  %v108 = vmul.f32 %v55, %v65
  %v109 = vmul.f32 %v56, %v65
  %v110 = vmul.f32 %v57, %v65
  %v111 = vmul.f32 %v58, %v65
  %v112 = vmul.f32 %v59, %v65
  %v113 = vmul.f32 %v60, %v65
  %v114 = vmul.f32 %v61, %v65
  %v115 = vmul.f32 %v62, %v65
  %v116 = vld [vmem:[%s2] sm:$0x1]
  %v118 = vperm.slane %v116, 0
  %v120 = vadd.f32 %v67, %v118
  %v121 = vadd.f32 %v68, %v118
  %v122 = vadd.f32 %v69, %v118
  %v123 = vadd.f32 %v70, %v118
  %v124 = vadd.f32 %v71, %v118
  %v125 = vadd.f32 %v72, %v118
  %v126 = vadd.f32 %v73, %v118
  %v127 = vadd.f32 %v74, %v118
  %v128 = vadd.f32 %v75, %v118
  %v129 = vadd.f32 %v76, %v118
  %v130 = vadd.f32 %v77, %v118
  %v131 = vadd.f32 %v78, %v118
  %v132 = vadd.f32 %v79, %v118
  %v133 = vadd.f32 %v80, %v118
  %v134 = vadd.f32 %v81, %v118
  %v135 = vadd.f32 %v82, %v118
  %v136 = vadd.f32 %v83, %v118
  %v137 = vadd.f32 %v84, %v118
  %v138 = vadd.f32 %v85, %v118
  %v139 = vadd.f32 %v86, %v118
  %v140 = vadd.f32 %v87, %v118
  %v141 = vadd.f32 %v88, %v118
  %v142 = vadd.f32 %v89, %v118
  %v143 = vadd.f32 %v90, %v118
  %v144 = vadd.f32 %v91, %v118
  %v145 = vadd.f32 %v92, %v118
  %v146 = vadd.f32 %v93, %v118
  %v147 = vadd.f32 %v94, %v118
  %v148 = vadd.f32 %v95, %v118
  %v149 = vadd.f32 %v96, %v118
  %v150 = vadd.f32 %v97, %v118
  %v151 = vadd.f32 %v98, %v118
  %v152 = vadd.f32 %v99, %v118
  %v153 = vadd.f32 %v100, %v118
  %v154 = vadd.f32 %v101, %v118
  %v155 = vadd.f32 %v102, %v118
  %v156 = vadd.f32 %v103, %v118
  %v157 = vadd.f32 %v104, %v118
  %v158 = vadd.f32 %v105, %v118
  %v159 = vadd.f32 %v106, %v118
  %v160 = vadd.f32 %v107, %v118
  %v161 = vadd.f32 %v108, %v118
  %v162 = vadd.f32 %v109, %v118
  %v163 = vadd.f32 %v110, %v118
  %v164 = vadd.f32 %v111, %v118
  %v165 = vadd.f32 %v112, %v118
  %v166 = vadd.f32 %v113, %v118
  %v167 = vadd.f32 %v114, %v118
  %v168 = vadd.f32 %v115, %v118
  %169 = vst [vmem:[%s3] sm:$0xff] %v120
  %170 = vst [vmem:[%s3 + $0x8] sm:$0xff] %v121
  %171 = vst [vmem:[%s3 + $0x10] sm:$0xff] %v122
  %172 = vst [vmem:[%s3 + $0x18] sm:$0xff] %v123
  %173 = vst [vmem:[%s3 + $0x20] sm:$0xff] %v124
  %174 = vst [vmem:[%s3 + $0x28] sm:$0xff] %v125
  %175 = vst [vmem:[%s3 + $0x30] sm:$0xff] %v126
  %176 = vst [vmem:[%s3 + $0x38] sm:$0xff] %v127
  %177 = vst [vmem:[%s3 + $0x40] sm:$0xff] %v128
  %178 = vst [vmem:[%s3 + $0x48] sm:$0xff] %v129
  %179 = vst [vmem:[%s3 + $0x50] sm:$0xff] %v130
  %180 = vst [vmem:[%s3 + $0x58] sm:$0xff] %v131
  %181 = vst [vmem:[%s3 + $0x60] sm:$0xff] %v132
  %182 = vst [vmem:[%s3 + $0x68] sm:$0xff] %v133
  %183 = vst [vmem:[%s3 + $0x70] sm:$0xff] %v134
  %184 = vst [vmem:[%s3 + $0x78] sm:$0xff] %v135
  %185 = vst [vmem:[%s3 + $0x80] sm:$0xff] %v136
  %186 = vst [vmem:[%s3 + $0x88] sm:$0xff] %v137
  %187 = vst [vmem:[%s3 + $0x90] sm:$0xff] %v138
  %188 = vst [vmem:[%s3 + $0x98] sm:$0xff] %v139
  %189 = vst [vmem:[%s3 + $0xa0] sm:$0xff] %v140
  %190 = vst [vmem:[%s3 + $0xa8] sm:$0xff] %v141
  %191 = vst [vmem:[%s3 + $0xb0] sm:$0xff] %v142
  %192 = vst [vmem:[%s3 + $0xb8] sm:$0xff] %v143
  %193 = vst [vmem:[%s3 + $0xc0] sm:$0xff] %v144
  %194 = vst [vmem:[%s3 + $0xc8] sm:$0xff] %v145
  %195 = vst [vmem:[%s3 + $0xd0] sm:$0xff] %v146
  %196 = vst [vmem:[%s3 + $0xd8] sm:$0xff] %v147
  %197 = vst [vmem:[%s3 + $0xe0] sm:$0xff] %v148
  %198 = vst [vmem:[%s3 + $0xe8] sm:$0xff] %v149
  %199 = vst [vmem:[%s3 + $0xf0] sm:$0xff] %v150
  %200 = vst [vmem:[%s3 + $0xf8] sm:$0xff] %v151
  %201 = vst [vmem:[%s3 + $0x100] sm:$0xff] %v152
  %202 = vst [vmem:[%s3 + $0x108] sm:$0xff] %v153
  %203 = vst [vmem:[%s3 + $0x110] sm:$0xff] %v154
  %204 = vst [vmem:[%s3 + $0x118] sm:$0xff] %v155
  %205 = vst [vmem:[%s3 + $0x120] sm:$0xff] %v156
  %206 = vst [vmem:[%s3 + $0x128] sm:$0xff] %v157
  %207 = vst [vmem:[%s3 + $0x130] sm:$0xff] %v158
  %208 = vst [vmem:[%s3 + $0x138] sm:$0xff] %v159
  %209 = vst [vmem:[%s3 + $0x140] sm:$0xff] %v160
  %210 = vst [vmem:[%s3 + $0x148] sm:$0xff] %v161
  %211 = vst [vmem:[%s3 + $0x150] sm:$0xff] %v162
  %212 = vst [vmem:[%s3 + $0x158] sm:$0xff] %v163
  %213 = vst [vmem:[%s3 + $0x160] sm:$0xff] %v164
  %214 = vst [vmem:[%s3 + $0x168] sm:$0xff] %v165
  %215 = vst [vmem:[%s3 + $0x170] sm:$0xff] %v166
  %216 = vst [vmem:[%s3 + $0x178] sm:$0xff] %v167
  %217 = vst [vmem:[%s3 + $0x180] sm:$0xff] %v168
  // Predicated region
  $region14: #{conv2d_normed.3} parent=0 // pred_check
    _
  $region15: #{conv2d_normed.3} parent=0 // pred_check_branch
    %219 = sbr.rel (0) target = $region17
  $region16: #{conv2d_normed.3} parent=0 // pred_region
    _
  $region17: #{conv2d_normed.3} parent=0 // pred_fallthru
    _
  // Predicated region
  $region18: #{conv2d_normed.3} parent=0 // pred_check
    _
  $region19: #{conv2d_normed.3} parent=0 // pred_check_branch
    %221 = sbr.rel (0) target = $region21
  $region20: #{conv2d_normed.3} parent=0 // pred_region
    _
  $region21: #{conv2d_normed.3} parent=0 // pred_fallthru
    _

// kernel: conv2d_normed.2
$region0: #{conv2d_normed.2}
  #allocation0 [shape = 'u32[]', space=smem, size = 0x4, offset = 0x4, fixed_abs, tag = 'smem constant byte address 0x4 - core index']
  #allocation1 [shape = 'u32[72,128]{1,0:T(1,128)}', space=vmem, size = 0x9000, scoped, tag = 'internal scratch']
  #allocation2 [shape = 'f32[392,128]{1,0:T(8,128)}', space=vmem, size = 0x31000, scoped, tag = 'scratch operand']
  %s0 = inlined_call_operand.vmem [shape: bf16[392,128], index: 0, kind: input, shape index: {}]
  %s1 = inlined_call_operand.vmem [shape: bf16[128,128], index: 1, kind: input, shape index: {}]
  %s2 = inlined_call_operand.vmem [shape: f32[392,128], index: 2, kind: output, shape index: {0}]
  %s3 = inlined_call_operand.vmem [shape: f32[8,128], index: 3, kind: output, shape index: {1}]
  %4 = xla_tuple %s2, %s3
  %s5 = sld [smem:[#allocation0]]
  $region34: #{conv2d_normed.2} parent=0
    _
  %s7 = ssub.s32 1, %s5
  %s8 = scalar_select 0, %s7, %s5
  // Predicated region
  $region2: #{conv2d_normed.2} parent=0 // pred_check
    _
  $region3: #{conv2d_normed.2} parent=0 // pred_check_branch
    %10 = sbr.rel (0) target = $region5
  $region4: #{conv2d_normed.2} parent=0 // pred_region
    _
  $region5: #{conv2d_normed.2} parent=0 // pred_fallthru
    _
  // Predicated region
  $region6: #{conv2d_normed.2} parent=0 // pred_check
    _
  $region7: #{conv2d_normed.2} parent=0 // pred_check_branch
    %12 = sbr.rel (0) target = $region9
  $region8: #{conv2d_normed.2} parent=0 // pred_region
    _
  $region9: #{conv2d_normed.2} parent=0 // pred_fallthru
    _
  %p13 = scmp.eq.s32.totalorder 0, 0
  // Predicated region
  $region10: #{conv2d_normed.2} parent=0 // pred_check
    %p14 = pneg %p13
  $region11: #{conv2d_normed.2} parent=0 // pred_check_branch
    %16 = sbr.rel (%p14) target = $region13
  $region12: #{conv2d_normed.2} parent=0 // pred_region
    %17 = vst [vmem:[#allocation2] sm:$0xff] 0.0
    %18 = vst [vmem:[#allocation2 + $0x8] sm:$0xff] 0.0
    %19 = vst [vmem:[#allocation2 + $0x10] sm:$0xff] 0.0
    %20 = vst [vmem:[#allocation2 + $0x18] sm:$0xff] 0.0
    %21 = vst [vmem:[#allocation2 + $0x20] sm:$0xff] 0.0
    %22 = vst [vmem:[#allocation2 + $0x28] sm:$0xff] 0.0
    %23 = vst [vmem:[#allocation2 + $0x30] sm:$0xff] 0.0
    %24 = vst [vmem:[#allocation2 + $0x38] sm:$0xff] 0.0
    %25 = vst [vmem:[#allocation2 + $0x40] sm:$0xff] 0.0
    %26 = vst [vmem:[#allocation2 + $0x48] sm:$0xff] 0.0
    %27 = vst [vmem:[#allocation2 + $0x50] sm:$0xff] 0.0
    %28 = vst [vmem:[#allocation2 + $0x58] sm:$0xff] 0.0
    %29 = vst [vmem:[#allocation2 + $0x60] sm:$0xff] 0.0
    %30 = vst [vmem:[#allocation2 + $0x68] sm:$0xff] 0.0
    %31 = vst [vmem:[#allocation2 + $0x70] sm:$0xff] 0.0
    %32 = vst [vmem:[#allocation2 + $0x78] sm:$0xff] 0.0
    %33 = vst [vmem:[#allocation2 + $0x80] sm:$0xff] 0.0
    %34 = vst [vmem:[#allocation2 + $0x88] sm:$0xff] 0.0
    %35 = vst [vmem:[#allocation2 + $0x90] sm:$0xff] 0.0
    %36 = vst [vmem:[#allocation2 + $0x98] sm:$0xff] 0.0
    %37 = vst [vmem:[#allocation2 + $0xa0] sm:$0xff] 0.0
    %38 = vst [vmem:[#allocation2 + $0xa8] sm:$0xff] 0.0
    %39 = vst [vmem:[#allocation2 + $0xb0] sm:$0xff] 0.0
    %40 = vst [vmem:[#allocation2 + $0xb8] sm:$0xff] 0.0
    %41 = vst [vmem:[#allocation2 + $0xc0] sm:$0xff] 0.0
    %42 = vst [vmem:[#allocation2 + $0xc8] sm:$0xff] 0.0
    %43 = vst [vmem:[#allocation2 + $0xd0] sm:$0xff] 0.0
    %44 = vst [vmem:[#allocation2 + $0xd8] sm:$0xff] 0.0
    %45 = vst [vmem:[#allocation2 + $0xe0] sm:$0xff] 0.0
    %46 = vst [vmem:[#allocation2 + $0xe8] sm:$0xff] 0.0
    %47 = vst [vmem:[#allocation2 + $0xf0] sm:$0xff] 0.0
    %48 = vst [vmem:[#allocation2 + $0xf8] sm:$0xff] 0.0
    %49 = vst [vmem:[#allocation2 + $0x100] sm:$0xff] 0.0
    %50 = vst [vmem:[#allocation2 + $0x108] sm:$0xff] 0.0
    %51 = vst [vmem:[#allocation2 + $0x110] sm:$0xff] 0.0
    %52 = vst [vmem:[#allocation2 + $0x118] sm:$0xff] 0.0
    %53 = vst [vmem:[#allocation2 + $0x120] sm:$0xff] 0.0
    %54 = vst [vmem:[#allocation2 + $0x128] sm:$0xff] 0.0
    %55 = vst [vmem:[#allocation2 + $0x130] sm:$0xff] 0.0
    %56 = vst [vmem:[#allocation2 + $0x138] sm:$0xff] 0.0
    %57 = vst [vmem:[#allocation2 + $0x140] sm:$0xff] 0.0
    %58 = vst [vmem:[#allocation2 + $0x148] sm:$0xff] 0.0
    %59 = vst [vmem:[#allocation2 + $0x150] sm:$0xff] 0.0
    %60 = vst [vmem:[#allocation2 + $0x158] sm:$0xff] 0.0
    %61 = vst [vmem:[#allocation2 + $0x160] sm:$0xff] 0.0
    %62 = vst [vmem:[#allocation2 + $0x168] sm:$0xff] 0.0
    %63 = vst [vmem:[#allocation2 + $0x170] sm:$0xff] 0.0
    %64 = vst [vmem:[#allocation2 + $0x178] sm:$0xff] 0.0
    %65 = vst [vmem:[#allocation2 + $0x180] sm:$0xff] 0.0
  $region13: #{conv2d_normed.2} parent=0 // pred_fallthru
    _
  %s66 = smul.u32 0, 128
  %s67 = smul.u32 0, 128
  %s68 = sshra.s32 %s67, 7
  %s69 = sand.u32 %s67, 127
  %s70 = sshra.s32 %s66, 3
  %s71 = sand.u32 %s66, 7
  %s72 = sadd.s32 %s68, %s70
  %s73 = smul.addr %s72, 4
  %s74 = scalar_lea.vmem %s1, %s73
  %v75 = vld [vmem:[%s74] sm:$0xf]
  %v76 = vld [vmem:[%s74 + $0x4] sm:$0xf]
  %v77 = vld [vmem:[%s74 + $0x8] sm:$0xf]
  %v78 = vld [vmem:[%s74 + $0xc] sm:$0xf]
  %v79 = vld [vmem:[%s74 + $0x10] sm:$0xf]
  %v80 = vld [vmem:[%s74 + $0x14] sm:$0xf]
  %v81 = vld [vmem:[%s74 + $0x18] sm:$0xf]
  %v82 = vld [vmem:[%s74 + $0x1c] sm:$0xf]
  %v83 = vld [vmem:[%s74 + $0x20] sm:$0xf]
  %v84 = vld [vmem:[%s74 + $0x24] sm:$0xf]
  %v85 = vld [vmem:[%s74 + $0x28] sm:$0xf]
  %v86 = vld [vmem:[%s74 + $0x2c] sm:$0xf]
  %v87 = vld [vmem:[%s74 + $0x30] sm:$0xf]
  %v88 = vld [vmem:[%s74 + $0x34] sm:$0xf]
  %v89 = vld [vmem:[%s74 + $0x38] sm:$0xf]
  %v90 = vld [vmem:[%s74 + $0x3c] sm:$0xf]
  %v91 = vld [vmem:[#allocation2] sm:$0xff]
  %v92 = vld [vmem:[#allocation2 + $0x8] sm:$0xff]
  %v93 = vld [vmem:[#allocation2 + $0x10] sm:$0xff]
  %v94 = vld [vmem:[#allocation2 + $0x18] sm:$0xff]
  %v95 = vld [vmem:[#allocation2 + $0x20] sm:$0xff]
  %v96 = vld [vmem:[#allocation2 + $0x28] sm:$0xff]
  %v97 = vld [vmem:[#allocation2 + $0x30] sm:$0xff]
  %v98 = vld [vmem:[#allocation2 + $0x38] sm:$0xff]
  %v99 = vld [vmem:[#allocation2 + $0x40] sm:$0xff]
  %v100 = vld [vmem:[#allocation2 + $0x48] sm:$0xff]
  %v101 = vld [vmem:[#allocation2 + $0x50] sm:$0xff]
  %v102 = vld [vmem:[#allocation2 + $0x58] sm:$0xff]
  %v103 = vld [vmem:[#allocation2 + $0x60] sm:$0xff]
  %v104 = vld [vmem:[#allocation2 + $0x68] sm:$0xff]
  %v105 = vld [vmem:[#allocation2 + $0x70] sm:$0xff]
  %v106 = vld [vmem:[#allocation2 + $0x78] sm:$0xff]
  %v107 = vld [vmem:[#allocation2 + $0x80] sm:$0xff]
  %v108 = vld [vmem:[#allocation2 + $0x88] sm:$0xff]
  %v109 = vld [vmem:[#allocation2 + $0x90] sm:$0xff]
  %v110 = vld [vmem:[#allocation2 + $0x98] sm:$0xff]
  %v111 = vld [vmem:[#allocation2 + $0xa0] sm:$0xff]
  %v112 = vld [vmem:[#allocation2 + $0xa8] sm:$0xff]
  %v113 = vld [vmem:[#allocation2 + $0xb0] sm:$0xff]
  %v114 = vld [vmem:[#allocation2 + $0xb8] sm:$0xff]
  %v115 = vld [vmem:[#allocation2 + $0xc0] sm:$0xff]
  %v116 = vld [vmem:[#allocation2 + $0xc8] sm:$0xff]
  %v117 = vld [vmem:[#allocation2 + $0xd0] sm:$0xff]
  %v118 = vld [vmem:[#allocation2 + $0xd8] sm:$0xff]
  %v119 = vld [vmem:[#allocation2 + $0xe0] sm:$0xff]
  %v120 = vld [vmem:[#allocation2 + $0xe8] sm:$0xff]
  %v121 = vld [vmem:[#allocation2 + $0xf0] sm:$0xff]
  %v122 = vld [vmem:[#allocation2 + $0xf8] sm:$0xff]
  %v123 = vld [vmem:[#allocation2 + $0x100] sm:$0xff]
  %v124 = vld [vmem:[#allocation2 + $0x108] sm:$0xff]
  %v125 = vld [vmem:[#allocation2 + $0x110] sm:$0xff]
  %v126 = vld [vmem:[#allocation2 + $0x118] sm:$0xff]
  %v127 = vld [vmem:[#allocation2 + $0x120] sm:$0xff]
  %v128 = vld [vmem:[#allocation2 + $0x128] sm:$0xff]
  %v129 = vld [vmem:[#allocation2 + $0x130] sm:$0xff]
  %v130 = vld [vmem:[#allocation2 + $0x138] sm:$0xff]
  %v131 = vld [vmem:[#allocation2 + $0x140] sm:$0xff]
  %v132 = vld [vmem:[#allocation2 + $0x148] sm:$0xff]
  %v133 = vld [vmem:[#allocation2 + $0x150] sm:$0xff]
  %v134 = vld [vmem:[#allocation2 + $0x158] sm:$0xff]
  %v135 = vld [vmem:[#allocation2 + $0x160] sm:$0xff]
  %v136 = vld [vmem:[#allocation2 + $0x168] sm:$0xff]
  %v137 = vld [vmem:[#allocation2 + $0x170] sm:$0xff]
  %v138 = vld [vmem:[#allocation2 + $0x178] sm:$0xff]
  %v139 = vld [vmem:[#allocation2 + $0x180] sm:$0xff]
  %v140 = vld [vmem:[%s0] sm:$0xf]
  %v141 = vld [vmem:[%s0 + $0x4] sm:$0xf]
  %v142 = vld [vmem:[%s0 + $0x8] sm:$0xf]
  %v143 = vld [vmem:[%s0 + $0xc] sm:$0xf]
  %v144 = vld [vmem:[%s0 + $0x10] sm:$0xf]
  %v145 = vld [vmem:[%s0 + $0x14] sm:$0xf]
  %v146 = vld [vmem:[%s0 + $0x18] sm:$0xf]
  %v147 = vld [vmem:[%s0 + $0x1c] sm:$0xf]
  %v148 = vld [vmem:[%s0 + $0x20] sm:$0xf]
  %v149 = vld [vmem:[%s0 + $0x24] sm:$0xf]
  %v150 = vld [vmem:[%s0 + $0x28] sm:$0xf]
  %v151 = vld [vmem:[%s0 + $0x2c] sm:$0xf]
  %v152 = vld [vmem:[%s0 + $0x30] sm:$0xf]
  %v153 = vld [vmem:[%s0 + $0x34] sm:$0xf]
  %v154 = vld [vmem:[%s0 + $0x38] sm:$0xf]
  %v155 = vld [vmem:[%s0 + $0x3c] sm:$0xf]
  %v156 = vld [vmem:[%s0 + $0x40] sm:$0xf]
  %v157 = vld [vmem:[%s0 + $0x44] sm:$0xf]
  %v158 = vld [vmem:[%s0 + $0x48] sm:$0xf]
  %v159 = vld [vmem:[%s0 + $0x4c] sm:$0xf]
  %v160 = vld [vmem:[%s0 + $0x50] sm:$0xf]
  %v161 = vld [vmem:[%s0 + $0x54] sm:$0xf]
  %v162 = vld [vmem:[%s0 + $0x58] sm:$0xf]
  %v163 = vld [vmem:[%s0 + $0x5c] sm:$0xf]
  %v164 = vld [vmem:[%s0 + $0x60] sm:$0xf]
  %v165 = vld [vmem:[%s0 + $0x64] sm:$0xf]
  %v166 = vld [vmem:[%s0 + $0x68] sm:$0xf]
  %v167 = vld [vmem:[%s0 + $0x6c] sm:$0xf]
  %v168 = vld [vmem:[%s0 + $0x70] sm:$0xf]
  %v169 = vld [vmem:[%s0 + $0x74] sm:$0xf]
  %v170 = vld [vmem:[%s0 + $0x78] sm:$0xf]
  %v171 = vld [vmem:[%s0 + $0x7c] sm:$0xf]
  %v172 = vld [vmem:[%s0 + $0x80] sm:$0xf]
  %v173 = vld [vmem:[%s0 + $0x84] sm:$0xf]
  %v174 = vld [vmem:[%s0 + $0x88] sm:$0xf]
  %v175 = vld [vmem:[%s0 + $0x8c] sm:$0xf]
  %v176 = vld [vmem:[%s0 + $0x90] sm:$0xf]
  %v177 = vld [vmem:[%s0 + $0x94] sm:$0xf]
  %v178 = vld [vmem:[%s0 + $0x98] sm:$0xf]
  %v179 = vld [vmem:[%s0 + $0x9c] sm:$0xf]
  %v180 = vld [vmem:[%s0 + $0xa0] sm:$0xf]
  %v181 = vld [vmem:[%s0 + $0xa4] sm:$0xf]
  %v182 = vld [vmem:[%s0 + $0xa8] sm:$0xf]
  %v183 = vld [vmem:[%s0 + $0xac] sm:$0xf]
  %v184 = vld [vmem:[%s0 + $0xb0] sm:$0xf]
  %v185 = vld [vmem:[%s0 + $0xb4] sm:$0xf]
  %v186 = vld [vmem:[%s0 + $0xb8] sm:$0xf]
  %v187 = vld [vmem:[%s0 + $0xbc] sm:$0xf]
  %v188 = vld [vmem:[%s0 + $0xc0] sm:$0xf]
  %v238 = vunpack.c.l.b16 %v140
  %v239 = vunpack.c.l.b16 %v141
  %v240 = vunpack.c.l.b16 %v142
  %v241 = vunpack.c.l.b16 %v143
  %v242 = vunpack.c.l.b16 %v144
  %v243 = vunpack.c.l.b16 %v145
  %v244 = vunpack.c.l.b16 %v146
  %v245 = vunpack.c.l.b16 %v147
  %v246 = vunpack.c.l.b16 %v148
  %v247 = vunpack.c.l.b16 %v149
  %v248 = vunpack.c.l.b16 %v150
  %v249 = vunpack.c.l.b16 %v151
  %v250 = vunpack.c.l.b16 %v152
  %v251 = vunpack.c.l.b16 %v153
  %v252 = vunpack.c.l.b16 %v154
  %v253 = vunpack.c.l.b16 %v155
  %v254 = vunpack.c.l.b16 %v156
  %v255 = vunpack.c.l.b16 %v157
  %v256 = vunpack.c.l.b16 %v158
  %v257 = vunpack.c.l.b16 %v159
  %v258 = vunpack.c.l.b16 %v160
  %v259 = vunpack.c.l.b16 %v161
  %v260 = vunpack.c.l.b16 %v162
  %v261 = vunpack.c.l.b16 %v163
  %v262 = vunpack.c.l.b16 %v164
  %v263 = vunpack.c.l.b16 %v165
  %v264 = vunpack.c.l.b16 %v166
  %v265 = vunpack.c.l.b16 %v167
  %v266 = vunpack.c.l.b16 %v168
  %v267 = vunpack.c.l.b16 %v169
  %v268 = vunpack.c.l.b16 %v170
  %v269 = vunpack.c.l.b16 %v171
  %v270 = vunpack.c.l.b16 %v172
  %v271 = vunpack.c.l.b16 %v173
  %v272 = vunpack.c.l.b16 %v174
  %v273 = vunpack.c.l.b16 %v175
  %v274 = vunpack.c.l.b16 %v176
  %v275 = vunpack.c.l.b16 %v177
  %v276 = vunpack.c.l.b16 %v178
  %v277 = vunpack.c.l.b16 %v179
  %v278 = vunpack.c.l.b16 %v180
  %v279 = vunpack.c.l.b16 %v181
  %v280 = vunpack.c.l.b16 %v182
  %v281 = vunpack.c.l.b16 %v183
  %v282 = vunpack.c.l.b16 %v184
  %v283 = vunpack.c.l.b16 %v185
  %v284 = vunpack.c.l.b16 %v186
  %v285 = vunpack.c.l.b16 %v187
  %v286 = vunpack.c.l.b16 %v188
  %v287 = vpack.c.b16 %v239, %v238
  %v288 = vpack.c.b16 %v241, %v240
  %v289 = vpack.c.b16 %v243, %v242
  %v290 = vpack.c.b16 %v245, %v244
  %v291 = vpack.c.b16 %v247, %v246
  %v292 = vpack.c.b16 %v249, %v248
  %v293 = vpack.c.b16 %v251, %v250
  %v294 = vpack.c.b16 %v253, %v252
  %v295 = vpack.c.b16 %v255, %v254
  %v296 = vpack.c.b16 %v257, %v256
  %v297 = vpack.c.b16 %v259, %v258
  %v298 = vpack.c.b16 %v261, %v260
  %v299 = vpack.c.b16 %v263, %v262
  %v300 = vpack.c.b16 %v265, %v264
  %v301 = vpack.c.b16 %v267, %v266
  %v302 = vpack.c.b16 %v269, %v268
  %v303 = vpack.c.b16 %v271, %v270
  %v304 = vpack.c.b16 %v273, %v272
  %v305 = vpack.c.b16 %v275, %v274
  %v306 = vpack.c.b16 %v277, %v276
  %v307 = vpack.c.b16 %v279, %v278
  %v308 = vpack.c.b16 %v281, %v280
  %v309 = vpack.c.b16 %v283, %v282
  %v310 = vpack.c.b16 %v285, %v284
  %v311 = vpack.c.b16 %v286, %v286
  %v353 = vunpack.c.l.b16 %v75
  %v354 = vunpack.c.l.b16 %v76
  %v355 = vunpack.c.l.b16 %v77
  %v356 = vunpack.c.l.b16 %v78
  %v357 = vunpack.c.l.b16 %v79
  %v358 = vunpack.c.l.b16 %v80
  %v359 = vunpack.c.l.b16 %v81
  %v360 = vunpack.c.l.b16 %v82
  %v361 = vunpack.c.l.b16 %v83
  %v362 = vunpack.c.l.b16 %v84
  %v363 = vunpack.c.l.b16 %v85
  %v364 = vunpack.c.l.b16 %v86
  %v365 = vunpack.c.l.b16 %v87
  %v366 = vunpack.c.l.b16 %v88
  %v367 = vunpack.c.l.b16 %v89
  %v368 = vunpack.c.l.b16 %v90
  %v369 = vpack.c.b16 %v354, %v353
  %v370 = vpack.c.b16 %v356, %v355
  %v371 = vpack.c.b16 %v358, %v357
  %v372 = vpack.c.b16 %v360, %v359
  %v373 = vpack.c.b16 %v362, %v361
  %v374 = vpack.c.b16 %v364, %v363
  %v375 = vpack.c.b16 %v366, %v365
  %v376 = vpack.c.b16 %v368, %v367
  %385 = vmatpush.bf16.msra.mxu0 %v376
  %386 = vmatpush.bf16.msra.mxu0 %v375
  %387 = vmatpush.bf16.msra.mxu0 %v374
  %388 = vmatpush.bf16.msra.mxu0 %v373
  %389 = vmatpush.bf16.msra.mxu0 %v372
  %390 = vmatpush.bf16.msra.mxu0 %v371
  %391 = vmatpush.bf16.msra.mxu0 %v370
  %392 = vmatpush.bf16.msra.mxu0 %v369
  %393 = vmatmul.bf16.gmra.mxu0 %v287
  %v394 = vpop.f32.mrf.mxu0
  %v395 = vadd.f32 0.0, %v394
  %v396 = vpop.f32.mrf.mxu0
  %v397 = vadd.f32 0.0, %v396
  %398 = vmatmul.bf16.gmra.mxu0 %v288
  %v399 = vpop.f32.mrf.mxu0
  %v400 = vadd.f32 0.0, %v399
  %v401 = vpop.f32.mrf.mxu0
  %v402 = vadd.f32 0.0, %v401
  %403 = vmatmul.bf16.gmra.mxu0 %v289
  %v404 = vpop.f32.mrf.mxu0
  %v405 = vadd.f32 0.0, %v404
  %v406 = vpop.f32.mrf.mxu0
  %v407 = vadd.f32 0.0, %v406
  %408 = vmatmul.bf16.gmra.mxu0 %v290
  %v409 = vpop.f32.mrf.mxu0
  %v410 = vadd.f32 0.0, %v409
  %v411 = vpop.f32.mrf.mxu0
  %v412 = vadd.f32 0.0, %v411
  %413 = vmatmul.bf16.gmra.mxu0 %v291
  %v414 = vpop.f32.mrf.mxu0
  %v415 = vadd.f32 0.0, %v414
  %v416 = vpop.f32.mrf.mxu0
  %v417 = vadd.f32 0.0, %v416
  %418 = vmatmul.bf16.gmra.mxu0 %v292
  %v419 = vpop.f32.mrf.mxu0
  %v420 = vadd.f32 0.0, %v419
  %v421 = vpop.f32.mrf.mxu0
  %v422 = vadd.f32 0.0, %v421
  %423 = vmatmul.bf16.gmra.mxu0 %v293
  %v424 = vpop.f32.mrf.mxu0
  %v425 = vadd.f32 0.0, %v424
  %v426 = vpop.f32.mrf.mxu0
  %v427 = vadd.f32 0.0, %v426
  %428 = vmatmul.bf16.gmra.mxu0 %v294
  %v429 = vpop.f32.mrf.mxu0
  %v430 = vadd.f32 0.0, %v429
  %v431 = vpop.f32.mrf.mxu0
  %v432 = vadd.f32 0.0, %v431
  %433 = vmatmul.bf16.gmra.mxu0 %v295
  %v434 = vpop.f32.mrf.mxu0
  %v435 = vadd.f32 0.0, %v434
  %v436 = vpop.f32.mrf.mxu0
  %v437 = vadd.f32 0.0, %v436
  %438 = vmatmul.bf16.gmra.mxu0 %v296
  %v439 = vpop.f32.mrf.mxu0
  %v440 = vadd.f32 0.0, %v439
  %v441 = vpop.f32.mrf.mxu0
  %v442 = vadd.f32 0.0, %v441
  %443 = vmatmul.bf16.gmra.mxu0 %v297
  %v444 = vpop.f32.mrf.mxu0
  %v445 = vadd.f32 0.0, %v444
  %v446 = vpop.f32.mrf.mxu0
  %v447 = vadd.f32 0.0, %v446
  %448 = vmatmul.bf16.gmra.mxu0 %v298
  %v449 = vpop.f32.mrf.mxu0
  %v450 = vadd.f32 0.0, %v449
  %v451 = vpop.f32.mrf.mxu0
  %v452 = vadd.f32 0.0, %v451
  %453 = vmatmul.bf16.gmra.mxu0 %v299
  %v454 = vpop.f32.mrf.mxu0
  %v455 = vadd.f32 0.0, %v454
  %v456 = vpop.f32.mrf.mxu0
  %v457 = vadd.f32 0.0, %v456
  %458 = vmatmul.bf16.gmra.mxu0 %v300
  %v459 = vpop.f32.mrf.mxu0
  %v460 = vadd.f32 0.0, %v459
  %v461 = vpop.f32.mrf.mxu0
  %v462 = vadd.f32 0.0, %v461
  %463 = vmatmul.bf16.gmra.mxu0 %v301
  %v464 = vpop.f32.mrf.mxu0
  %v465 = vadd.f32 0.0, %v464
  %v466 = vpop.f32.mrf.mxu0
  %v467 = vadd.f32 0.0, %v466
  %468 = vmatmul.bf16.gmra.mxu0 %v302
  %v469 = vpop.f32.mrf.mxu0
  %v470 = vadd.f32 0.0, %v469
  %v471 = vpop.f32.mrf.mxu0
  %v472 = vadd.f32 0.0, %v471
  %473 = vmatmul.bf16.gmra.mxu0 %v303
  %v474 = vpop.f32.mrf.mxu0
  %v475 = vadd.f32 0.0, %v474
  %v476 = vpop.f32.mrf.mxu0
  %v477 = vadd.f32 0.0, %v476
  %478 = vmatmul.bf16.gmra.mxu0 %v304
  %v479 = vpop.f32.mrf.mxu0
  %v480 = vadd.f32 0.0, %v479
  %v481 = vpop.f32.mrf.mxu0
  %v482 = vadd.f32 0.0, %v481
  %483 = vmatmul.bf16.gmra.mxu0 %v305
  %v484 = vpop.f32.mrf.mxu0
  %v485 = vadd.f32 0.0, %v484
  %v486 = vpop.f32.mrf.mxu0
  %v487 = vadd.f32 0.0, %v486
  %488 = vmatmul.bf16.gmra.mxu0 %v306
  %v489 = vpop.f32.mrf.mxu0
  %v490 = vadd.f32 0.0, %v489
  %v491 = vpop.f32.mrf.mxu0
  %v492 = vadd.f32 0.0, %v491
  %493 = vmatmul.bf16.gmra.mxu0 %v307
  %v494 = vpop.f32.mrf.mxu0
  %v495 = vadd.f32 0.0, %v494
  %v496 = vpop.f32.mrf.mxu0
  %v497 = vadd.f32 0.0, %v496
  %498 = vmatmul.bf16.gmra.mxu0 %v308
  %v499 = vpop.f32.mrf.mxu0
  %v500 = vadd.f32 0.0, %v499
  %v501 = vpop.f32.mrf.mxu0
  %v502 = vadd.f32 0.0, %v501
  %503 = vmatmul.bf16.gmra.mxu0 %v309
  %v504 = vpop.f32.mrf.mxu0
  %v505 = vadd.f32 0.0, %v504
  %v506 = vpop.f32.mrf.mxu0
  %v507 = vadd.f32 0.0, %v506
  %508 = vmatmul.bf16.gmra.mxu0 %v310
  %v509 = vpop.f32.mrf.mxu0
  %v510 = vadd.f32 0.0, %v509
  %v511 = vpop.f32.mrf.mxu0
  %v512 = vadd.f32 0.0, %v511
  %513 = vmatmul.bf16.gmra.mxu0 %v311
  %v514 = vpop.f32.mrf.mxu0
  %v515 = vadd.f32 0.0, %v514
  %v516 = vpop.f32.mrf.mxu0
  %517 = vdwg.mxu0
  %v518 = vadd.f32 %v91, %v395
  %v519 = vadd.f32 %v92, %v397
  %v520 = vadd.f32 %v93, %v400
  %v521 = vadd.f32 %v94, %v402
  %v522 = vadd.f32 %v95, %v405
  %v523 = vadd.f32 %v96, %v407
  %v524 = vadd.f32 %v97, %v410
  %v525 = vadd.f32 %v98, %v412
  %v526 = vadd.f32 %v99, %v415
  %v527 = vadd.f32 %v100, %v417
  %v528 = vadd.f32 %v101, %v420
  %v529 = vadd.f32 %v102, %v422
  %v530 = vadd.f32 %v103, %v425
  %v531 = vadd.f32 %v104, %v427
  %v532 = vadd.f32 %v105, %v430
  %v533 = vadd.f32 %v106, %v432
  %v534 = vadd.f32 %v107, %v435
  %v535 = vadd.f32 %v108, %v437
  %v536 = vadd.f32 %v109, %v440
  %v537 = vadd.f32 %v110, %v442
  %v538 = vadd.f32 %v111, %v445
  %v539 = vadd.f32 %v112, %v447
  %v540 = vadd.f32 %v113, %v450
  %v541 = vadd.f32 %v114, %v452
  %v542 = vadd.f32 %v115, %v455
  %v543 = vadd.f32 %v116, %v457
  %v544 = vadd.f32 %v117, %v460
  %v545 = vadd.f32 %v118, %v462
  %v546 = vadd.f32 %v119, %v465
  %v547 = vadd.f32 %v120, %v467
  %v548 = vadd.f32 %v121, %v470
  %v549 = vadd.f32 %v122, %v472
  %v550 = vadd.f32 %v123, %v475
  %v551 = vadd.f32 %v124, %v477
  %v552 = vadd.f32 %v125, %v480
  %v553 = vadd.f32 %v126, %v482
  %v554 = vadd.f32 %v127, %v485
  %v555 = vadd.f32 %v128, %v487
  %v556 = vadd.f32 %v129, %v490
  %v557 = vadd.f32 %v130, %v492
  %v558 = vadd.f32 %v131, %v495
  %v559 = vadd.f32 %v132, %v497
  %v560 = vadd.f32 %v133, %v500
  %v561 = vadd.f32 %v134, %v502
  %v562 = vadd.f32 %v135, %v505
  %v563 = vadd.f32 %v136, %v507
  %v564 = vadd.f32 %v137, %v510
  %v565 = vadd.f32 %v138, %v512
  %v566 = vadd.f32 %v139, %v515
  %567 = vst [vmem:[#allocation2] sm:$0xff] %v518
  %568 = vst [vmem:[#allocation2 + $0x8] sm:$0xff] %v519
  %569 = vst [vmem:[#allocation2 + $0x10] sm:$0xff] %v520
  %570 = vst [vmem:[#allocation2 + $0x18] sm:$0xff] %v521
  %571 = vst [vmem:[#allocation2 + $0x20] sm:$0xff] %v522
  %572 = vst [vmem:[#allocation2 + $0x28] sm:$0xff] %v523
  %573 = vst [vmem:[#allocation2 + $0x30] sm:$0xff] %v524
  %574 = vst [vmem:[#allocation2 + $0x38] sm:$0xff] %v525
  %575 = vst [vmem:[#allocation2 + $0x40] sm:$0xff] %v526
  %576 = vst [vmem:[#allocation2 + $0x48] sm:$0xff] %v527
  %577 = vst [vmem:[#allocation2 + $0x50] sm:$0xff] %v528
  %578 = vst [vmem:[#allocation2 + $0x58] sm:$0xff] %v529
  %579 = vst [vmem:[#allocation2 + $0x60] sm:$0xff] %v530
  %580 = vst [vmem:[#allocation2 + $0x68] sm:$0xff] %v531
  %581 = vst [vmem:[#allocation2 + $0x70] sm:$0xff] %v532
  %582 = vst [vmem:[#allocation2 + $0x78] sm:$0xff] %v533
  %583 = vst [vmem:[#allocation2 + $0x80] sm:$0xff] %v534
  %584 = vst [vmem:[#allocation2 + $0x88] sm:$0xff] %v535
  %585 = vst [vmem:[#allocation2 + $0x90] sm:$0xff] %v536
  %586 = vst [vmem:[#allocation2 + $0x98] sm:$0xff] %v537
  %587 = vst [vmem:[#allocation2 + $0xa0] sm:$0xff] %v538
  %588 = vst [vmem:[#allocation2 + $0xa8] sm:$0xff] %v539
  %589 = vst [vmem:[#allocation2 + $0xb0] sm:$0xff] %v540
  %590 = vst [vmem:[#allocation2 + $0xb8] sm:$0xff] %v541
  %591 = vst [vmem:[#allocation2 + $0xc0] sm:$0xff] %v542
  %592 = vst [vmem:[#allocation2 + $0xc8] sm:$0xff] %v543
  %593 = vst [vmem:[#allocation2 + $0xd0] sm:$0xff] %v544
  %594 = vst [vmem:[#allocation2 + $0xd8] sm:$0xff] %v545
  %595 = vst [vmem:[#allocation2 + $0xe0] sm:$0xff] %v546
  %596 = vst [vmem:[#allocation2 + $0xe8] sm:$0xff] %v547
  %597 = vst [vmem:[#allocation2 + $0xf0] sm:$0xff] %v548
  %598 = vst [vmem:[#allocation2 + $0xf8] sm:$0xff] %v549
  %599 = vst [vmem:[#allocation2 + $0x100] sm:$0xff] %v550
  %600 = vst [vmem:[#allocation2 + $0x108] sm:$0xff] %v551
  %601 = vst [vmem:[#allocation2 + $0x110] sm:$0xff] %v552
  %602 = vst [vmem:[#allocation2 + $0x118] sm:$0xff] %v553
  %603 = vst [vmem:[#allocation2 + $0x120] sm:$0xff] %v554
  %604 = vst [vmem:[#allocation2 + $0x128] sm:$0xff] %v555
  %605 = vst [vmem:[#allocation2 + $0x130] sm:$0xff] %v556
  %606 = vst [vmem:[#allocation2 + $0x138] sm:$0xff] %v557
  %607 = vst [vmem:[#allocation2 + $0x140] sm:$0xff] %v558
  %608 = vst [vmem:[#allocation2 + $0x148] sm:$0xff] %v559
  %609 = vst [vmem:[#allocation2 + $0x150] sm:$0xff] %v560
  %610 = vst [vmem:[#allocation2 + $0x158] sm:$0xff] %v561
  %611 = vst [vmem:[#allocation2 + $0x160] sm:$0xff] %v562
  %612 = vst [vmem:[#allocation2 + $0x168] sm:$0xff] %v563
  %613 = vst [vmem:[#allocation2 + $0x170] sm:$0xff] %v564
  %614 = vst [vmem:[#allocation2 + $0x178] sm:$0xff] %v565
  %615 = vst [vmem:[#allocation2 + $0x180] sm:$0xff] %v566
  // Predicated region
  $region14: #{conv2d_normed.2} parent=0 // pred_check
    %p616 = pneg %p13
  $region15: #{conv2d_normed.2} parent=0 // pred_check_branch
    %618 = sbr.rel (%p616) target = $region17
  $region16: #{conv2d_normed.2} parent=0 // pred_region
    %v619 = vld [vmem:[#allocation2] sm:$0xff]
    %v620 = vld [vmem:[#allocation2 + $0x8] sm:$0xff]
    %v621 = vld [vmem:[#allocation2 + $0x10] sm:$0xff]
    %v622 = vld [vmem:[#allocation2 + $0x18] sm:$0xff]
    %v623 = vld [vmem:[#allocation2 + $0x20] sm:$0xff]
    %v624 = vld [vmem:[#allocation2 + $0x28] sm:$0xff]
    %v625 = vld [vmem:[#allocation2 + $0x30] sm:$0xff]
    %v626 = vld [vmem:[#allocation2 + $0x38] sm:$0xff]
    %v627 = vld [vmem:[#allocation2 + $0x40] sm:$0xff]
    %v628 = vld [vmem:[#allocation2 + $0x48] sm:$0xff]
    %v629 = vld [vmem:[#allocation2 + $0x50] sm:$0xff]
    %v630 = vld [vmem:[#allocation2 + $0x58] sm:$0xff]
    %v631 = vld [vmem:[#allocation2 + $0x60] sm:$0xff]
    %v632 = vld [vmem:[#allocation2 + $0x68] sm:$0xff]
    %v633 = vld [vmem:[#allocation2 + $0x70] sm:$0xff]
    %v634 = vld [vmem:[#allocation2 + $0x78] sm:$0xff]
    %v635 = vld [vmem:[#allocation2 + $0x80] sm:$0xff]
    %v636 = vld [vmem:[#allocation2 + $0x88] sm:$0xff]
    %v637 = vld [vmem:[#allocation2 + $0x90] sm:$0xff]
    %v638 = vld [vmem:[#allocation2 + $0x98] sm:$0xff]
    %v639 = vld [vmem:[#allocation2 + $0xa0] sm:$0xff]
    %v640 = vld [vmem:[#allocation2 + $0xa8] sm:$0xff]
    %v641 = vld [vmem:[#allocation2 + $0xb0] sm:$0xff]
    %v642 = vld [vmem:[#allocation2 + $0xb8] sm:$0xff]
    %v643 = vld [vmem:[#allocation2 + $0xc0] sm:$0xff]
    %v644 = vld [vmem:[#allocation2 + $0xc8] sm:$0xff]
    %v645 = vld [vmem:[#allocation2 + $0xd0] sm:$0xff]
    %v646 = vld [vmem:[#allocation2 + $0xd8] sm:$0xff]
    %v647 = vld [vmem:[#allocation2 + $0xe0] sm:$0xff]
    %v648 = vld [vmem:[#allocation2 + $0xe8] sm:$0xff]
    %v649 = vld [vmem:[#allocation2 + $0xf0] sm:$0xff]
    %v650 = vld [vmem:[#allocation2 + $0xf8] sm:$0xff]
    %v651 = vld [vmem:[#allocation2 + $0x100] sm:$0xff]
    %v652 = vld [vmem:[#allocation2 + $0x108] sm:$0xff]
    %v653 = vld [vmem:[#allocation2 + $0x110] sm:$0xff]
    %v654 = vld [vmem:[#allocation2 + $0x118] sm:$0xff]
    %v655 = vld [vmem:[#allocation2 + $0x120] sm:$0xff]
    %v656 = vld [vmem:[#allocation2 + $0x128] sm:$0xff]
    %v657 = vld [vmem:[#allocation2 + $0x130] sm:$0xff]
    %v658 = vld [vmem:[#allocation2 + $0x138] sm:$0xff]
    %v659 = vld [vmem:[#allocation2 + $0x140] sm:$0xff]
    %v660 = vld [vmem:[#allocation2 + $0x148] sm:$0xff]
    %v661 = vld [vmem:[#allocation2 + $0x150] sm:$0xff]
    %v662 = vld [vmem:[#allocation2 + $0x158] sm:$0xff]
    %v663 = vld [vmem:[#allocation2 + $0x160] sm:$0xff]
    %v664 = vld [vmem:[#allocation2 + $0x168] sm:$0xff]
    %v665 = vld [vmem:[#allocation2 + $0x170] sm:$0xff]
    %v666 = vld [vmem:[#allocation2 + $0x178] sm:$0xff]
    %v667 = vld [vmem:[#allocation2 + $0x180] sm:$0xff]
    %668 = vst [vmem:[%s2] sm:$0xff] %v619
    %669 = vst [vmem:[%s2 + $0x8] sm:$0xff] %v620
    %670 = vst [vmem:[%s2 + $0x10] sm:$0xff] %v621
    %671 = vst [vmem:[%s2 + $0x18] sm:$0xff] %v622
    %672 = vst [vmem:[%s2 + $0x20] sm:$0xff] %v623
    %673 = vst [vmem:[%s2 + $0x28] sm:$0xff] %v624
    %674 = vst [vmem:[%s2 + $0x30] sm:$0xff] %v625
    %675 = vst [vmem:[%s2 + $0x38] sm:$0xff] %v626
    %676 = vst [vmem:[%s2 + $0x40] sm:$0xff] %v627
    %677 = vst [vmem:[%s2 + $0x48] sm:$0xff] %v628
    %678 = vst [vmem:[%s2 + $0x50] sm:$0xff] %v629
    %679 = vst [vmem:[%s2 + $0x58] sm:$0xff] %v630
    %680 = vst [vmem:[%s2 + $0x60] sm:$0xff] %v631
    %681 = vst [vmem:[%s2 + $0x68] sm:$0xff] %v632
    %682 = vst [vmem:[%s2 + $0x70] sm:$0xff] %v633
    %683 = vst [vmem:[%s2 + $0x78] sm:$0xff] %v634
    %684 = vst [vmem:[%s2 + $0x80] sm:$0xff] %v635
    %685 = vst [vmem:[%s2 + $0x88] sm:$0xff] %v636
    %686 = vst [vmem:[%s2 + $0x90] sm:$0xff] %v637
    %687 = vst [vmem:[%s2 + $0x98] sm:$0xff] %v638
    %688 = vst [vmem:[%s2 + $0xa0] sm:$0xff] %v639
    %689 = vst [vmem:[%s2 + $0xa8] sm:$0xff] %v640
    %690 = vst [vmem:[%s2 + $0xb0] sm:$0xff] %v641
    %691 = vst [vmem:[%s2 + $0xb8] sm:$0xff] %v642
    %692 = vst [vmem:[%s2 + $0xc0] sm:$0xff] %v643
    %693 = vst [vmem:[%s2 + $0xc8] sm:$0xff] %v644
    %694 = vst [vmem:[%s2 + $0xd0] sm:$0xff] %v645
    %695 = vst [vmem:[%s2 + $0xd8] sm:$0xff] %v646
    %696 = vst [vmem:[%s2 + $0xe0] sm:$0xff] %v647
    %697 = vst [vmem:[%s2 + $0xe8] sm:$0xff] %v648
    %698 = vst [vmem:[%s2 + $0xf0] sm:$0xff] %v649
    %699 = vst [vmem:[%s2 + $0xf8] sm:$0xff] %v650
    %700 = vst [vmem:[%s2 + $0x100] sm:$0xff] %v651
    %701 = vst [vmem:[%s2 + $0x108] sm:$0xff] %v652
    %702 = vst [vmem:[%s2 + $0x110] sm:$0xff] %v653
    %703 = vst [vmem:[%s2 + $0x118] sm:$0xff] %v654
    %704 = vst [vmem:[%s2 + $0x120] sm:$0xff] %v655
    %705 = vst [vmem:[%s2 + $0x128] sm:$0xff] %v656
    %706 = vst [vmem:[%s2 + $0x130] sm:$0xff] %v657
    %707 = vst [vmem:[%s2 + $0x138] sm:$0xff] %v658
    %708 = vst [vmem:[%s2 + $0x140] sm:$0xff] %v659
    %709 = vst [vmem:[%s2 + $0x148] sm:$0xff] %v660
    %710 = vst [vmem:[%s2 + $0x150] sm:$0xff] %v661
    %711 = vst [vmem:[%s2 + $0x158] sm:$0xff] %v662
    %712 = vst [vmem:[%s2 + $0x160] sm:$0xff] %v663
    %713 = vst [vmem:[%s2 + $0x168] sm:$0xff] %v664
    %714 = vst [vmem:[%s2 + $0x170] sm:$0xff] %v665
    %715 = vst [vmem:[%s2 + $0x178] sm:$0xff] %v666
    %716 = vst [vmem:[%s2 + $0x180] sm:$0xff] %v667
    %s717 = smul.u32 0, 392
    %s718 = ssub.s32 392, %s717
    %p719 = scmp.lt.s32.totalorder %s718, 392
    %s720 = scalar_select %p719, %s718, 392
    %s721 = scvt.s32.f32 %s720
    %v722 = vstv %s721
    %v723 = vrcp.pop %v722
    %v724 = vmul.f32 %v722, %v723
    %v725 = vsub.f32 1.0, %v724
    %v726 = vmul.f32 %v723, %v725
    %v727 = vadd.f32 %v723, %v726
    %vm728 = vweird.f32 %v722
    %vm729 = vweird.f32 %v723
    %vm730 = vmor %vm728, %vm729
    %v731 = vsel %vm730, %v723, %v727
    %v732 = vand.u32 2147483647, %v722
    %vm733 = vcmp.eq.f32.partialorder %v732, 8.507059e+37
    %v734 = vand.u32 %v722, 2147483648
    %v735 = vor.u32 1.1754944e-38, %v734
    %v736 = vsel %vm733, %v735, %v731
    %s737 = vtos %v736
    %v738 = vadd.f32 %v619, %v620
    %v739 = vadd.f32 %v738, %v621
    %v740 = vadd.f32 %v739, %v622
    %v741 = vadd.f32 %v740, %v623
    %v742 = vadd.f32 %v741, %v624
    %v743 = vadd.f32 %v742, %v625
    %v744 = vadd.f32 %v743, %v626
    %v745 = vadd.f32 %v744, %v627
    %v746 = vadd.f32 %v745, %v628
    %v747 = vadd.f32 %v746, %v629
    %v748 = vadd.f32 %v747, %v630
    %v749 = vadd.f32 %v748, %v631
    %v750 = vadd.f32 %v749, %v632
    %v751 = vadd.f32 %v750, %v633
    %v752 = vadd.f32 %v751, %v634
    %v753 = vadd.f32 %v752, %v635
    %v754 = vadd.f32 %v753, %v636
    %v755 = vadd.f32 %v754, %v637
    %v756 = vadd.f32 %v755, %v638
    %v757 = vadd.f32 %v756, %v639
    %v758 = vadd.f32 %v757, %v640
    %v759 = vadd.f32 %v758, %v641
    %v760 = vadd.f32 %v759, %v642
    %v761 = vadd.f32 %v760, %v643
    %v762 = vadd.f32 %v761, %v644
    %v763 = vadd.f32 %v762, %v645
    %v764 = vadd.f32 %v763, %v646
    %v765 = vadd.f32 %v764, %v647
    %v766 = vadd.f32 %v765, %v648
    %v767 = vadd.f32 %v766, %v649
    %v768 = vadd.f32 %v767, %v650
    %v769 = vadd.f32 %v768, %v651
    %v770 = vadd.f32 %v769, %v652
    %v771 = vadd.f32 %v770, %v653
    %v772 = vadd.f32 %v771, %v654
    %v773 = vadd.f32 %v772, %v655
    %v774 = vadd.f32 %v773, %v656
    %v775 = vadd.f32 %v774, %v657
    %v776 = vadd.f32 %v775, %v658
    %v777 = vadd.f32 %v776, %v659
    %v778 = vadd.f32 %v777, %v660
    %v779 = vadd.f32 %v778, %v661
    %v780 = vadd.f32 %v779, %v662
    %v781 = vadd.f32 %v780, %v663
    %v782 = vadd.f32 %v781, %v664
    %v783 = vadd.f32 %v782, %v665
    %v784 = vadd.f32 %v783, %v666
    %v785 = vadd.f32 %v784, %v667
    %v786 = vrot.slane %v785, 4
    %v787 = vadd.f32 %v785, %v786
    %v788 = vrot.slane %v787, 2
    %v789 = vadd.f32 %v787, %v788
    %v790 = vrot.slane %v789, 1
    %v791 = vadd.f32 %v789, %v790
    %v792 = vstv %s737
    %v793 = vmul.f32 %v791, %v792
    %v794 = vlaneseq
    %v795 = vshrl.u32 %v794, 7
    %v796 = vadd.s32 %v795, 8
    %v797 = vadd.s32 %v795, 16
    %v798 = vadd.s32 %v795, 24
    %v799 = vadd.s32 %v795, 32
    %v800 = vadd.s32 %v795, 40
    %v801 = vadd.s32 %v795, 48
    %v802 = vadd.s32 %v795, 56
    %v803 = vadd.s32 %v795, 64
    %v804 = vadd.s32 %v795, 72
    %v805 = vadd.s32 %v795, 80
    %v806 = vadd.s32 %v795, 88
    %v807 = vadd.s32 %v795, 96
    %v808 = vadd.s32 %v795, 104
    %v809 = vadd.s32 %v795, 112
    %v810 = vadd.s32 %v795, 120
    %v811 = vadd.s32 %v795, 128
    %v812 = vadd.s32 %v795, 136
    %v813 = vadd.s32 %v795, 144
    %v814 = vadd.s32 %v795, 152
    %v815 = vadd.s32 %v795, 160
    %v816 = vadd.s32 %v795, 168
    %v817 = vadd.s32 %v795, 176
    %v818 = vadd.s32 %v795, 184
    %v819 = vadd.s32 %v795, 192
    %v820 = vadd.s32 %v795, 200
    %v821 = vadd.s32 %v795, 208
    %v822 = vadd.s32 %v795, 216
    %v823 = vadd.s32 %v795, 224
    %v824 = vadd.s32 %v795, 232
    %v825 = vadd.s32 %v795, 240
    %v826 = vadd.s32 %v795, 248
    %v827 = vadd.s32 %v795, 256
    %v828 = vadd.s32 %v795, 264
    %v829 = vadd.s32 %v795, 272
    %v830 = vadd.s32 %v795, 280
    %v831 = vadd.s32 %v795, 288
    %v832 = vadd.s32 %v795, 296
    %v833 = vadd.s32 %v795, 304
    %v834 = vadd.s32 %v795, 312
    %v835 = vadd.s32 %v795, 320
    %v836 = vadd.s32 %v795, 328
    %v837 = vadd.s32 %v795, 336
    %v838 = vadd.s32 %v795, 344
    %v839 = vadd.s32 %v795, 352
    %v840 = vadd.s32 %v795, 360
    %v841 = vadd.s32 %v795, 368
    %v842 = vadd.s32 %v795, 376
    %v843 = vadd.s32 %v795, 384
    %v844 = vstv %s720
    %vm845 = vcmp.lt.s32.totalorder %v795, %v844
    %vm846 = vcmp.lt.s32.totalorder %v796, %v844
    %vm847 = vcmp.lt.s32.totalorder %v797, %v844
    %vm848 = vcmp.lt.s32.totalorder %v798, %v844
    %vm849 = vcmp.lt.s32.totalorder %v799, %v844
    %vm850 = vcmp.lt.s32.totalorder %v800, %v844
    %vm851 = vcmp.lt.s32.totalorder %v801, %v844
    %vm852 = vcmp.lt.s32.totalorder %v802, %v844
    %vm853 = vcmp.lt.s32.totalorder %v803, %v844
    %vm854 = vcmp.lt.s32.totalorder %v804, %v844
    %vm855 = vcmp.lt.s32.totalorder %v805, %v844
    %vm856 = vcmp.lt.s32.totalorder %v806, %v844
    %vm857 = vcmp.lt.s32.totalorder %v807, %v844
    %vm858 = vcmp.lt.s32.totalorder %v808, %v844
    %vm859 = vcmp.lt.s32.totalorder %v809, %v844
    %vm860 = vcmp.lt.s32.totalorder %v810, %v844
    %vm861 = vcmp.lt.s32.totalorder %v811, %v844
    %vm862 = vcmp.lt.s32.totalorder %v812, %v844
    %vm863 = vcmp.lt.s32.totalorder %v813, %v844
    %vm864 = vcmp.lt.s32.totalorder %v814, %v844
    %vm865 = vcmp.lt.s32.totalorder %v815, %v844
    %vm866 = vcmp.lt.s32.totalorder %v816, %v844
    %vm867 = vcmp.lt.s32.totalorder %v817, %v844
    %vm868 = vcmp.lt.s32.totalorder %v818, %v844
    %vm869 = vcmp.lt.s32.totalorder %v819, %v844
    %vm870 = vcmp.lt.s32.totalorder %v820, %v844
    %vm871 = vcmp.lt.s32.totalorder %v821, %v844
    %vm872 = vcmp.lt.s32.totalorder %v822, %v844
    %vm873 = vcmp.lt.s32.totalorder %v823, %v844
    %vm874 = vcmp.lt.s32.totalorder %v824, %v844
    %vm875 = vcmp.lt.s32.totalorder %v825, %v844
    %vm876 = vcmp.lt.s32.totalorder %v826, %v844
    %vm877 = vcmp.lt.s32.totalorder %v827, %v844
    %vm878 = vcmp.lt.s32.totalorder %v828, %v844
    %vm879 = vcmp.lt.s32.totalorder %v829, %v844
    %vm880 = vcmp.lt.s32.totalorder %v830, %v844
    %vm881 = vcmp.lt.s32.totalorder %v831, %v844
    %vm882 = vcmp.lt.s32.totalorder %v832, %v844
    %vm883 = vcmp.lt.s32.totalorder %v833, %v844
    %vm884 = vcmp.lt.s32.totalorder %v834, %v844
    %vm885 = vcmp.lt.s32.totalorder %v835, %v844
    %vm886 = vcmp.lt.s32.totalorder %v836, %v844
    %vm887 = vcmp.lt.s32.totalorder %v837, %v844
    %vm888 = vcmp.lt.s32.totalorder %v838, %v844
    %vm889 = vcmp.lt.s32.totalorder %v839, %v844
    %vm890 = vcmp.lt.s32.totalorder %v840, %v844
    %vm891 = vcmp.lt.s32.totalorder %v841, %v844
    %vm892 = vcmp.lt.s32.totalorder %v842, %v844
    %vm893 = vcmp.lt.s32.totalorder %v843, %v844
    %v894 = vsub.f32 %v619, %v793
    %v895 = vsub.f32 %v620, %v793
    %v896 = vsub.f32 %v621, %v793
    %v897 = vsub.f32 %v622, %v793
    %v898 = vsub.f32 %v623, %v793
    %v899 = vsub.f32 %v624, %v793
    %v900 = vsub.f32 %v625, %v793
    %v901 = vsub.f32 %v626, %v793
    %v902 = vsub.f32 %v627, %v793
    %v903 = vsub.f32 %v628, %v793
    %v904 = vsub.f32 %v629, %v793
    %v905 = vsub.f32 %v630, %v793
    %v906 = vsub.f32 %v631, %v793
    %v907 = vsub.f32 %v632, %v793
    %v908 = vsub.f32 %v633, %v793
    %v909 = vsub.f32 %v634, %v793
    %v910 = vsub.f32 %v635, %v793
    %v911 = vsub.f32 %v636, %v793
    %v912 = vsub.f32 %v637, %v793
    %v913 = vsub.f32 %v638, %v793
    %v914 = vsub.f32 %v639, %v793
    %v915 = vsub.f32 %v640, %v793
    %v916 = vsub.f32 %v641, %v793
    %v917 = vsub.f32 %v642, %v793
    %v918 = vsub.f32 %v643, %v793
    %v919 = vsub.f32 %v644, %v793
    %v920 = vsub.f32 %v645, %v793
    %v921 = vsub.f32 %v646, %v793
    %v922 = vsub.f32 %v647, %v793
    %v923 = vsub.f32 %v648, %v793
    %v924 = vsub.f32 %v649, %v793
    %v925 = vsub.f32 %v650, %v793
    %v926 = vsub.f32 %v651, %v793
    %v927 = vsub.f32 %v652, %v793
    %v928 = vsub.f32 %v653, %v793
    %v929 = vsub.f32 %v654, %v793
    %v930 = vsub.f32 %v655, %v793
    %v931 = vsub.f32 %v656, %v793
    %v932 = vsub.f32 %v657, %v793
    %v933 = vsub.f32 %v658, %v793
    %v934 = vsub.f32 %v659, %v793
    %v935 = vsub.f32 %v660, %v793
    %v936 = vsub.f32 %v661, %v793
    %v937 = vsub.f32 %v662, %v793
    %v938 = vsub.f32 %v663, %v793
    %v939 = vsub.f32 %v664, %v793
    %v940 = vsub.f32 %v665, %v793
    %v941 = vsub.f32 %v666, %v793
    %v942 = vsub.f32 %v667, %v793
    %v943 = vsel %vm845, %v894, 0.0
    %v944 = vsel %vm846, %v895, 0.0
    %v945 = vsel %vm847, %v896, 0.0
    %v946 = vsel %vm848, %v897, 0.0
    %v947 = vsel %vm849, %v898, 0.0
    %v948 = vsel %vm850, %v899, 0.0
    %v949 = vsel %vm851, %v900, 0.0
    %v950 = vsel %vm852, %v901, 0.0
    %v951 = vsel %vm853, %v902, 0.0
    %v952 = vsel %vm854, %v903, 0.0
    %v953 = vsel %vm855, %v904, 0.0
    %v954 = vsel %vm856, %v905, 0.0
    %v955 = vsel %vm857, %v906, 0.0
    %v956 = vsel %vm858, %v907, 0.0
    %v957 = vsel %vm859, %v908, 0.0
    %v958 = vsel %vm860, %v909, 0.0
    %v959 = vsel %vm861, %v910, 0.0
    %v960 = vsel %vm862, %v911, 0.0
    %v961 = vsel %vm863, %v912, 0.0
    %v962 = vsel %vm864, %v913, 0.0
    %v963 = vsel %vm865, %v914, 0.0
    %v964 = vsel %vm866, %v915, 0.0
    %v965 = vsel %vm867, %v916, 0.0
    %v966 = vsel %vm868, %v917, 0.0
    %v967 = vsel %vm869, %v918, 0.0
    %v968 = vsel %vm870, %v919, 0.0
    %v969 = vsel %vm871, %v920, 0.0
    %v970 = vsel %vm872, %v921, 0.0
    %v971 = vsel %vm873, %v922, 0.0
    %v972 = vsel %vm874, %v923, 0.0
    %v973 = vsel %vm875, %v924, 0.0
    %v974 = vsel %vm876, %v925, 0.0
    %v975 = vsel %vm877, %v926, 0.0
    %v976 = vsel %vm878, %v927, 0.0
    %v977 = vsel %vm879, %v928, 0.0
    %v978 = vsel %vm880, %v929, 0.0
    %v979 = vsel %vm881, %v930, 0.0
    %v980 = vsel %vm882, %v931, 0.0
    %v981 = vsel %vm883, %v932, 0.0
    %v982 = vsel %vm884, %v933, 0.0
    %v983 = vsel %vm885, %v934, 0.0
    %v984 = vsel %vm886, %v935, 0.0
    %v985 = vsel %vm887, %v936, 0.0
    %v986 = vsel %vm888, %v937, 0.0
    %v987 = vsel %vm889, %v938, 0.0
    %v988 = vsel %vm890, %v939, 0.0
    %v989 = vsel %vm891, %v940, 0.0
    %v990 = vsel %vm892, %v941, 0.0
    %v991 = vsel %vm893, %v942, 0.0
    %v992 = vmul.f32 %v943, %v943
    %v993 = vmul.f32 %v944, %v944
    %v994 = vmul.f32 %v945, %v945
    %v995 = vmul.f32 %v946, %v946
    %v996 = vmul.f32 %v947, %v947
    %v997 = vmul.f32 %v948, %v948
    %v998 = vmul.f32 %v949, %v949
    %v999 = vmul.f32 %v950, %v950
    %v1000 = vmul.f32 %v951, %v951
    %v1001 = vmul.f32 %v952, %v952
    %v1002 = vmul.f32 %v953, %v953
    %v1003 = vmul.f32 %v954, %v954
    %v1004 = vmul.f32 %v955, %v955
    %v1005 = vmul.f32 %v956, %v956
    %v1006 = vmul.f32 %v957, %v957
    %v1007 = vmul.f32 %v958, %v958
    %v1008 = vmul.f32 %v959, %v959
    %v1009 = vmul.f32 %v960, %v960
    %v1010 = vmul.f32 %v961, %v961
    %v1011 = vmul.f32 %v962, %v962
    %v1012 = vmul.f32 %v963, %v963
    %v1013 = vmul.f32 %v964, %v964
    %v1014 = vmul.f32 %v965, %v965
    %v1015 = vmul.f32 %v966, %v966
    %v1016 = vmul.f32 %v967, %v967
    %v1017 = vmul.f32 %v968, %v968
    %v1018 = vmul.f32 %v969, %v969
    %v1019 = vmul.f32 %v970, %v970
    %v1020 = vmul.f32 %v971, %v971
    %v1021 = vmul.f32 %v972, %v972
    %v1022 = vmul.f32 %v973, %v973
    %v1023 = vmul.f32 %v974, %v974
    %v1024 = vmul.f32 %v975, %v975
    %v1025 = vmul.f32 %v976, %v976
    %v1026 = vmul.f32 %v977, %v977
    %v1027 = vmul.f32 %v978, %v978
    %v1028 = vmul.f32 %v979, %v979
    %v1029 = vmul.f32 %v980, %v980
    %v1030 = vmul.f32 %v981, %v981
    %v1031 = vmul.f32 %v982, %v982
    %v1032 = vmul.f32 %v983, %v983
    %v1033 = vmul.f32 %v984, %v984
    %v1034 = vmul.f32 %v985, %v985
    %v1035 = vmul.f32 %v986, %v986
    %v1036 = vmul.f32 %v987, %v987
    %v1037 = vmul.f32 %v988, %v988
    %v1038 = vmul.f32 %v989, %v989
    %v1039 = vmul.f32 %v990, %v990
    %v1040 = vmul.f32 %v991, %v991
    %v1041 = vadd.f32 %v992, %v993
    %v1042 = vadd.f32 %v1041, %v994
    %v1043 = vadd.f32 %v1042, %v995
    %v1044 = vadd.f32 %v1043, %v996
    %v1045 = vadd.f32 %v1044, %v997
    %v1046 = vadd.f32 %v1045, %v998
    %v1047 = vadd.f32 %v1046, %v999
    %v1048 = vadd.f32 %v1047, %v1000
    %v1049 = vadd.f32 %v1048, %v1001
    %v1050 = vadd.f32 %v1049, %v1002
    %v1051 = vadd.f32 %v1050, %v1003
    %v1052 = vadd.f32 %v1051, %v1004
    %v1053 = vadd.f32 %v1052, %v1005
    %v1054 = vadd.f32 %v1053, %v1006
    %v1055 = vadd.f32 %v1054, %v1007
    %v1056 = vadd.f32 %v1055, %v1008
    %v1057 = vadd.f32 %v1056, %v1009
    %v1058 = vadd.f32 %v1057, %v1010
    %v1059 = vadd.f32 %v1058, %v1011
    %v1060 = vadd.f32 %v1059, %v1012
    %v1061 = vadd.f32 %v1060, %v1013
    %v1062 = vadd.f32 %v1061, %v1014
    %v1063 = vadd.f32 %v1062, %v1015
    %v1064 = vadd.f32 %v1063, %v1016
    %v1065 = vadd.f32 %v1064, %v1017
    %v1066 = vadd.f32 %v1065, %v1018
    %v1067 = vadd.f32 %v1066, %v1019
    %v1068 = vadd.f32 %v1067, %v1020
    %v1069 = vadd.f32 %v1068, %v1021
    %v1070 = vadd.f32 %v1069, %v1022
    %v1071 = vadd.f32 %v1070, %v1023
    %v1072 = vadd.f32 %v1071, %v1024
    %v1073 = vadd.f32 %v1072, %v1025
    %v1074 = vadd.f32 %v1073, %v1026
    %v1075 = vadd.f32 %v1074, %v1027
    %v1076 = vadd.f32 %v1075, %v1028
    %v1077 = vadd.f32 %v1076, %v1029
    %v1078 = vadd.f32 %v1077, %v1030
    %v1079 = vadd.f32 %v1078, %v1031
    %v1080 = vadd.f32 %v1079, %v1032
    %v1081 = vadd.f32 %v1080, %v1033
    %v1082 = vadd.f32 %v1081, %v1034
    %v1083 = vadd.f32 %v1082, %v1035
    %v1084 = vadd.f32 %v1083, %v1036
    %v1085 = vadd.f32 %v1084, %v1037
    %v1086 = vadd.f32 %v1085, %v1038
    %v1087 = vadd.f32 %v1086, %v1039
    %v1088 = vadd.f32 %v1087, %v1040
    %v1089 = vrot.slane %v1088, 4
    %v1090 = vadd.f32 %v1088, %v1089
    %v1091 = vrot.slane %v1090, 2
    %v1092 = vadd.f32 %v1090, %v1091
    %v1093 = vrot.slane %v1092, 1
    %v1094 = vadd.f32 %v1092, %v1093
    %1095 = vst [vmem:[%s3] sm:$0xff] 0.0
    %1096 = vst [vmem:[%s3] sm:$0x1] %v791
    %1097 = vst [vmem:[%s3 + $0x1] sm:$0x1] %v1094
  $region17: #{conv2d_normed.2} parent=0 // pred_fallthru
    _
  // Predicated region
  $region18: #{conv2d_normed.2} parent=0 // pred_check
    _
  $region19: #{conv2d_normed.2} parent=0 // pred_check_branch
    %1099 = sbr.rel (0) target = $region21
  $region20: #{conv2d_normed.2} parent=0 // pred_region
    _
  $region21: #{conv2d_normed.2} parent=0 // pred_fallthru
    _
  // Predicated region
  $region22: #{conv2d_normed.2} parent=0 // pred_check
    _
  $region23: #{conv2d_normed.2} parent=0 // pred_check_branch
    %1101 = sbr.rel (0) target = $region25
  $region24: #{conv2d_normed.2} parent=0 // pred_region
    _
  $region25: #{conv2d_normed.2} parent=0 // pred_fallthru
    _
  // Predicated region
  $region26: #{conv2d_normed.2} parent=0 // pred_check
    _
  $region27: #{conv2d_normed.2} parent=0 // pred_check_branch
    %1103 = sbr.rel (0) target = $region29
  $region28: #{conv2d_normed.2} parent=0 // pred_region
    _
  $region29: #{conv2d_normed.2} parent=0 // pred_fallthru
    _
  // Predicated region
  $region30: #{conv2d_normed.2} parent=0 // pred_check
    _
  $region31: #{conv2d_normed.2} parent=0 // pred_check_branch
    %1105 = sbr.rel (0) target = $region33
  $region32: #{conv2d_normed.2} parent=0 // pred_region
    _
  $region33: #{conv2d_normed.2} parent=0 // pred_fallthru
    _

</llo_original>
